<compile_context>
chip_gen: v6e
topology: v6e:2x2x1
jax: 0.10.0
libtpu: 0.0.40
codegen_flags: <defaults>
</compile_context>

<pallas_src>
import jax
import jax.numpy as jnp
from jax.experimental import pallas as pl
from jax.experimental.pallas import tpu as pltpu

LANE = 128
SUBLANE = 8


def _round_up(n, m):
    return ((n + m - 1) // m) * m


def _pad2d(a, rows, cols):
    r, c = a.shape
    return jnp.pad(a, ((0, rows - r), (0, cols - c)))


# ----------------------------- fused Pallas kernel -----------------------------

def fused_graphegin_kernel(
        x_ref, adj_ref, pool_ref,
        # GNN layer 0 (BN/bias folded into weights, edge term precomputed)
        w1_0_ref, eb_0_ref, w2_0_ref, t2_0_ref,
        # GNN layer 1
        w1_1_ref, eb_1_ref, w2_1_ref, t2_1_ref,
        # prediction heads, one per hidden_rep entry [x, h1, h2]
        wp_0_ref, bp_0_ref, wp_1_ref, bp_1_ref, wp_2_ref, bp_2_ref,
        out_ref):
    adj = adj_ref[...]          # [Np, Np] bf16 (binary -> exact)
    pool = pool_ref[...]        # [Gp, Np] bf16 (one-hot -> exact)
    h0 = x_ref[...]             # [Np, Dp] bf16

    def gnn_layer(h_bf16, w1_ref, eb_ref, w2_ref, t2_ref):
        # agg = adj @ h   (self + neighbor aggregation, MXU, f32 accumulate)
        agg = jnp.dot(adj, h_bf16, preferred_element_type=jnp.float32)
        # MLP hidden layer with folded BN1: relu(agg @ W1' + edge_bias')
        z = jnp.dot(agg.astype(jnp.bfloat16), w1_ref[...],
                    preferred_element_type=jnp.float32) + eb_ref[...]
        z = jnp.maximum(z, 0.0)
        # MLP output layer with folded outer BN: relu(z @ W2' + t2')
        z = jnp.dot(z.astype(jnp.bfloat16), w2_ref[...],
                    preferred_element_type=jnp.float32) + t2_ref[...]
        return jnp.maximum(z, 0.0)                      # f32 [Np, Hp]

    def readout(h_bf16, wp_ref, bp_ref):
        # global_add_pool as a one-hot matmul, then linears_prediction[layer]
        pooled = jnp.dot(pool, h_bf16, preferred_element_type=jnp.float32)
        return (jnp.dot(pooled.astype(jnp.bfloat16), wp_ref[...],
                        preferred_element_type=jnp.float32) + bp_ref[...])

    # hidden_rep[0] = x
    score = readout(h0, wp_0_ref, bp_0_ref)

    # hidden_rep[1]
    h1 = gnn_layer(h0, w1_0_ref, eb_0_ref, w2_0_ref, t2_0_ref)
    h1_bf16 = h1.astype(jnp.bfloat16)
    score = score + readout(h1_bf16, wp_1_ref, bp_1_ref)

    # hidden_rep[2]
    h2 = gnn_layer(h1_bf16, w1_1_ref, eb_1_ref, w2_1_ref, t2_1_ref)
    score = score + readout(h2.astype(jnp.bfloat16), wp_2_ref, bp_2_ref)

    # F.dropout with p=0 / eval mode is the identity.
    out_ref[...] = score


# ------------------------------- host-side prep --------------------------------

def fold_and_pad(params, x, adj, edge_rep, pool_onehot):
    """Fold BN/bias/edge terms into weights, pad dims to lane/sublane multiples,
    cast MXU operands to bf16.  Returns the flat kernel-input list + dims."""
    N, Din = x.shape
    H = params["gnn_layers"][0]["w2"].shape[1]
    O = params["pred"][0]["w"].shape[1]
    G = pool_onehot.shape[0]
    Np = _round_up(N, LANE)        # lane-dense contraction / load dims
    Gp = _round_up(G, SUBLANE)     # unmasked sublane stores on the output
    Dp = _round_up(Din, LANE)
    Hp = _round_up(H, LANE)
    Op = _round_up(O, LANE)

    inputs = [
        _pad2d(x, Np, Dp).astype(jnp.bfloat16),
        _pad2d(adj, Np, Np).astype(jnp.bfloat16),
        _pad2d(pool_onehot, Gp, Np).astype(jnp.bfloat16),
    ]

    for li, lp in enumerate(params["gnn_layers"]):
        d_in_p = Dp if li == 0 else Hp
        s1, t1 = lp["bn1_scale"], lp["bn1_shift"]
        s2, t2 = lp["bn2_scale"], lp["bn2_shift"]
        # (agg@W1a + edge_rep@W1b + b1)*s1 + t1  ==  agg@(W1a*s1) + edge_bias
        w1_folded = lp["w1a"] * s1                                   # [Din, H]
        edge_bias = (edge_rep @ lp["w1b"] + lp["b1"]) * s1 + t1      # [N, H]
        # (z@W2 + b2)*s2 + t2  ==  z@(W2*s2) + (b2*s2 + t2)
        w2_folded = lp["w2"] * s2
        t2_folded = lp["b2"] * s2 + t2
        inputs += [
            _pad2d(w1_folded, d_in_p, Hp).astype(jnp.bfloat16),
            _pad2d(edge_bias, Np, Hp).astype(jnp.float32),
            _pad2d(w2_folded, Hp, Hp).astype(jnp.bfloat16),
            _pad2d(t2_folded, 1, Hp).astype(jnp.float32),
        ]

    for li, pp in enumerate(params["pred"]):
        d_in_p = Dp if li == 0 else Hp
        inputs += [
            _pad2d(pp["w"], d_in_p, Op).astype(jnp.bfloat16),
            _pad2d(pp["b"], 1, Op).astype(jnp.float32),
        ]
    return inputs, (G, Gp, Np, Dp, Hp, Op, O)


def graphegin_forward(x, adj, edge_rep, pool_onehot, params):
    """Full GraphEGIN forward (eval mode, final_dropout=0), fused in ONE kernel."""
    assert len(params["gnn_layers"]) == 2 and len(params["pred"]) == 3, (
        "fused kernel is specialized for num_layers=3 (2 GNN layers, 3 heads)")
    inputs, (G, Gp, Np, Dp, Hp, Op, O) = fold_and_pad(params, x, adj, edge_rep,
                                                      pool_onehot)
    # advisory cost hint for the XLA scheduler
    flops = 0
    d_prev = Dp
    for _ in range(2):
        flops += 2 * Np * Np * d_prev        # adj @ h
        flops += 2 * Np * d_prev * Hp        # agg @ W1'
        flops += 2 * Np * Hp * Hp            # z @ W2'
        d_prev = Hp
    for d_l in (Dp, Hp, Hp):
        flops += 2 * Gp * Np * d_l           # pool @ h_l
        flops += 2 * Gp * d_l * Op           # pooled @ Wp_l
    bytes_accessed = sum(int(a.size) * a.dtype.itemsize for a in inputs) + Gp * Op * 4

    vmem = pl.BlockSpec(memory_space=pltpu.MemorySpace.VMEM)
    score_padded = pl.pallas_call(
        fused_graphegin_kernel,
        out_shape=jax.ShapeDtypeStruct((Gp, Op), jnp.float32),
        in_specs=[vmem] * len(inputs),
        out_specs=vmem,
        cost_estimate=pl.CostEstimate(flops=int(flops), transcendentals=0,
                                      bytes_accessed=int(bytes_accessed)),
    )(*inputs)
    return score_padded[:G, :O]


# --------------------------- pure-JAX f32 reference ----------------------------

def graphegin_reference(x, adj, edge_rep, pool_onehot, params):
    hidden_rep = [x]
    h = x
    for lp in params["gnn_layers"]:
        pooled = jnp.concatenate([adj @ h, edge_rep], axis=1)
        w1 = jnp.concatenate([lp["w1a"], lp["w1b"]], axis=0)
        z = pooled @ w1 + lp["b1"]
        z = jnp.maximum(z * lp["bn1_scale"] + lp["bn1_shift"], 0.0)
        z = z @ lp["w2"] + lp["b2"]
        h = jnp.maximum(z * lp["bn2_scale"] + lp["bn2_shift"], 0.0)
        hidden_rep.append(h)
    score = jnp.zeros((pool_onehot.shape[0], params["pred"][0]["w"].shape[1]),
                      jnp.float32)
    for h_l, pp in zip(hidden_rep, params["pred"]):
        score = score + (pool_onehot @ h_l) @ pp["w"] + pp["b"]
    return score


# --------------------------- param / data setup --------------------------------

def make_params(key, num_layers, input_dim, hidden_dim, output_dim, num_edge_feat):
    def bn_affine(k, dim):
        k1, k2, k3, k4 = jax.random.split(k, 4)
        gamma = 1.0 + 0.1 * jax.random.normal(k1, (1, dim), jnp.float32)
        beta = 0.1 * jax.random.normal(k2, (1, dim), jnp.float32)
        rmean = 0.1 * jax.random.normal(k3, (1, dim), jnp.float32)
        rvar = jnp.abs(1.0 + 0.1 * jax.random.normal(k4, (1, dim), jnp.float32))
        scale = gamma / jnp.sqrt(rvar + 1e-5)
        shift = beta - rmean * scale
        return scale, shift

    params = {"gnn_layers": [], "pred": []}
    for layer in range(num_layers - 1):
        d_in = input_dim if layer == 0 else hidden_dim
        key, k1, k2, k3, k4, k5, k6 = jax.random.split(key, 7)
        s1, t1 = bn_affine(k5, hidden_dim)
        s2, t2 = bn_affine(k6, hidden_dim)
        params["gnn_layers"].append({
            # W1 of MLP(num_mlp_layers=2, d_in + num_edge_feat, hidden, hidden),
            # split into the node-feature part (w1a) and the edge_rep part (w1b).
            "w1a": 0.1 * jax.random.normal(k1, (d_in, hidden_dim), jnp.float32),
            "w1b": 0.1 * jax.random.normal(k2, (num_edge_feat, hidden_dim), jnp.float32),
            "b1": 0.1 * jax.random.normal(k3, (1, hidden_dim), jnp.float32),
            "bn1_scale": s1, "bn1_shift": t1,
            "w2": 0.1 * jax.random.normal(k4, (hidden_dim, hidden_dim), jnp.float32),
            "b2": jnp.zeros((1, hidden_dim), jnp.float32),
            "bn2_scale": s2, "bn2_shift": t2,
        })
    for layer in range(num_layers):
        d_in = input_dim if layer == 0 else hidden_dim
        key, k1, k2 = jax.random.split(key, 3)
        params["pred"].append({
            "w": 0.1 * jax.random.normal(k1, (d_in, output_dim), jnp.float32),
            "b": 0.1 * jax.random.normal(k2, (1, output_dim), jnp.float32),
        })
    return params


def make_graph(key, num_nodes, num_edge_feat, input_dim, num_graphs):
    # deterministic small graph: ring edges (both directions)
    src = jnp.arange(num_nodes, dtype=jnp.int32)
    dst = (src + 1) % num_nodes
    edge_index = jnp.concatenate(
        [jnp.stack([src, dst], 0), jnp.stack([dst, src], 0)], axis=1)   # [2, 2N]
    num_edges = edge_index.shape[1]
    k1, k2 = jax.random.split(key)
    edge_attr = jnp.abs(jax.random.normal(k1, (num_edges, num_edge_feat), jnp.float32))
    x = jax.random.normal(k2, (num_nodes, input_dim), jnp.float32)

    # __batch_to_embedadj (dot_update=False branch):
    #   adj_embed[i][i] = ones(E); adj_embed[src][dst] = edge_attr
    adj_embed = jnp.zeros((num_nodes, num_nodes, num_edge_feat), jnp.float32)
    adj_embed = adj_embed.at[jnp.arange(num_nodes), jnp.arange(num_nodes)].set(1.0)
    adj_embed = adj_embed.at[edge_index[0], edge_index[1]].set(edge_attr)
    edge_rep = jnp.sum(adj_embed, axis=1)                               # [N, E]
    adj = jnp.eye(num_nodes, dtype=jnp.float32)
    adj = adj.at[edge_index[0], edge_index[1]].set(1.0)                 # [N, N] binary

    # batch assignment -> one-hot pooling matrix [G, N]
    nodes_per_graph = num_nodes // num_graphs
    batch_vec = jnp.repeat(jnp.arange(num_graphs, dtype=jnp.int32), nodes_per_graph)
    pool_onehot = (batch_vec[None, :] == jnp.arange(num_graphs)[:, None]).astype(
        jnp.float32)
    return x, adj, edge_rep, pool_onehot


# ---------------------------------- main ----------------------------------------

if __name__ == "__main__":
    num_layers = 3
    num_mlp_layers = 2     # structure baked into fused_graphegin_kernel
    num_edge_feat = 4
    input_dim = 8
    hidden_dim = 32
    output_dim = 4
    num_nodes = 16
    num_graphs = 2

    key = jax.random.PRNGKey(0)
    kp, kg = jax.random.split(key)
    params = make_params(kp, num_layers, input_dim, hidden_dim, output_dim,
                         num_edge_feat)
    x, adj, edge_rep, pool_onehot = make_graph(kg, num_nodes, num_edge_feat,
                                               input_dim, num_graphs)

    forward = jax.jit(graphegin_forward)
    score = forward(x, adj, edge_rep, pool_onehot, params)
    score = jax.block_until_ready(score)

    assert score.shape == (num_graphs, output_dim)
    assert bool(jnp.all(jnp.isfinite(score)))

    # loose-tolerance check vs. f32 reference (kernel uses bf16 MXU operands)
    ref = graphegin_reference(x, adj, edge_rep, pool_onehot, params)
    tol = 0.1 + 0.05 * float(jnp.max(jnp.abs(ref)))
    assert bool(jnp.all(jnp.abs(score - ref) <= tol)), (
        f"max diff {float(jnp.max(jnp.abs(score - ref)))} > tol {tol}")

    print("KERNEL_OK")
</pallas_src>

<mosaic_0001>
module attributes {stable_mosaic.version = 11 : i64} {
  func.func @fused_graphegin_kernel(%arg0: memref<128x128xbf16, #tpu.memory_space<vmem>>, %arg1: memref<128x128xbf16, #tpu.memory_space<vmem>>, %arg2: memref<8x128xbf16, #tpu.memory_space<vmem>>, %arg3: memref<128x128xbf16, #tpu.memory_space<vmem>>, %arg4: memref<128x128xf32, #tpu.memory_space<vmem>>, %arg5: memref<128x128xbf16, #tpu.memory_space<vmem>>, %arg6: memref<1x128xf32, #tpu.memory_space<vmem>>, %arg7: memref<128x128xbf16, #tpu.memory_space<vmem>>, %arg8: memref<128x128xf32, #tpu.memory_space<vmem>>, %arg9: memref<128x128xbf16, #tpu.memory_space<vmem>>, %arg10: memref<1x128xf32, #tpu.memory_space<vmem>>, %arg11: memref<128x128xbf16, #tpu.memory_space<vmem>>, %arg12: memref<1x128xf32, #tpu.memory_space<vmem>>, %arg13: memref<128x128xbf16, #tpu.memory_space<vmem>>, %arg14: memref<1x128xf32, #tpu.memory_space<vmem>>, %arg15: memref<128x128xbf16, #tpu.memory_space<vmem>>, %arg16: memref<1x128xf32, #tpu.memory_space<vmem>>, %arg17: memref<8x128xf32, #tpu.memory_space<vmem>>) attributes {dimension_semantics = [], scalar_prefetch = 0 : i64, scratch_operands = 0 : i64, tpu.core_type = #tpu.core_type<tc>} {
    %c0 = arith.constant 0 : index
    %c0_0 = arith.constant 0 : index
    %0 = vector.load %arg1[%c0, %c0_0] : memref<128x128xbf16, #tpu.memory_space<vmem>>, vector<128x128xbf16>
    %c0_1 = arith.constant 0 : index
    %c0_2 = arith.constant 0 : index
    %1 = vector.load %arg2[%c0_1, %c0_2] : memref<8x128xbf16, #tpu.memory_space<vmem>>, vector<8x128xbf16>
    %c0_3 = arith.constant 0 : index
    %c0_4 = arith.constant 0 : index
    %2 = vector.load %arg0[%c0_3, %c0_4] : memref<128x128xbf16, #tpu.memory_space<vmem>>, vector<128x128xbf16>
    %cst = arith.constant dense<0.000000e+00> : vector<8x128xf32>
    %3 = tpu.matmul %1, %2, %cst {dimension_numbers = #tpu.dot_dimension_numbers<[1], [0], [0], [1], [0, 0, 1, 1], [], []>} : vector<8x128xbf16>, vector<128x128xbf16>, vector<8x128xf32> -> vector<8x128xf32>
    %4 = arith.truncf %3 : vector<8x128xf32> to vector<8x128xbf16>
    %c0_5 = arith.constant 0 : index
    %c0_6 = arith.constant 0 : index
    %5 = vector.load %arg11[%c0_5, %c0_6] : memref<128x128xbf16, #tpu.memory_space<vmem>>, vector<128x128xbf16>
    %cst_7 = arith.constant dense<0.000000e+00> : vector<8x128xf32>
    %6 = tpu.matmul %4, %5, %cst_7 {dimension_numbers = #tpu.dot_dimension_numbers<[1], [0], [0], [1], [0, 0, 1, 1], [], []>} : vector<8x128xbf16>, vector<128x128xbf16>, vector<8x128xf32> -> vector<8x128xf32>
    %c0_8 = arith.constant 0 : index
    %c0_9 = arith.constant 0 : index
    %7 = vector.load %arg12[%c0_8, %c0_9] : memref<1x128xf32, #tpu.memory_space<vmem>>, vector<1x128xf32>
    %8 = vector.broadcast %7 : vector<1x128xf32> to vector<8x128xf32>
    %9 = arith.addf %6, %8 : vector<8x128xf32>
    %cst_10 = arith.constant dense<0.000000e+00> : vector<128x128xf32>
    %10 = tpu.matmul %0, %2, %cst_10 {dimension_numbers = #tpu.dot_dimension_numbers<[1], [0], [0], [1], [0, 0, 1, 1], [], []>} : vector<128x128xbf16>, vector<128x128xbf16>, vector<128x128xf32> -> vector<128x128xf32>
    %11 = arith.truncf %10 : vector<128x128xf32> to vector<128x128xbf16>
    %c0_11 = arith.constant 0 : index
    %c0_12 = arith.constant 0 : index
    %12 = vector.load %arg3[%c0_11, %c0_12] : memref<128x128xbf16, #tpu.memory_space<vmem>>, vector<128x128xbf16>
    %cst_13 = arith.constant dense<0.000000e+00> : vector<128x128xf32>
    %13 = tpu.matmul %11, %12, %cst_13 {dimension_numbers = #tpu.dot_dimension_numbers<[1], [0], [0], [1], [0, 0, 1, 1], [], []>} : vector<128x128xbf16>, vector<128x128xbf16>, vector<128x128xf32> -> vector<128x128xf32>
    %c0_14 = arith.constant 0 : index
    %c0_15 = arith.constant 0 : index
    %14 = vector.load %arg4[%c0_14, %c0_15] : memref<128x128xf32, #tpu.memory_space<vmem>>, vector<128x128xf32>
    %15 = arith.addf %13, %14 : vector<128x128xf32>
    %cst_16 = arith.constant 0.000000e+00 : f32
    %16 = vector.broadcast %cst_16 : f32 to vector<128x128xf32>
    %17 = arith.maximumf %15, %16 : vector<128x128xf32>
    %18 = arith.truncf %17 : vector<128x128xf32> to vector<128x128xbf16>
    %c0_17 = arith.constant 0 : index
    %c0_18 = arith.constant 0 : index
    %19 = vector.load %arg5[%c0_17, %c0_18] : memref<128x128xbf16, #tpu.memory_space<vmem>>, vector<128x128xbf16>
    %cst_19 = arith.constant dense<0.000000e+00> : vector<128x128xf32>
    %20 = tpu.matmul %18, %19, %cst_19 {dimension_numbers = #tpu.dot_dimension_numbers<[1], [0], [0], [1], [0, 0, 1, 1], [], []>} : vector<128x128xbf16>, vector<128x128xbf16>, vector<128x128xf32> -> vector<128x128xf32>
    %c0_20 = arith.constant 0 : index
    %c0_21 = arith.constant 0 : index
    %21 = vector.load %arg6[%c0_20, %c0_21] : memref<1x128xf32, #tpu.memory_space<vmem>>, vector<1x128xf32>
    %22 = vector.broadcast %21 : vector<1x128xf32> to vector<128x128xf32>
    %23 = arith.addf %20, %22 : vector<128x128xf32>
    %cst_22 = arith.constant 0.000000e+00 : f32
    %24 = vector.broadcast %cst_22 : f32 to vector<128x128xf32>
    %25 = arith.maximumf %23, %24 : vector<128x128xf32>
    %26 = arith.truncf %25 : vector<128x128xf32> to vector<128x128xbf16>
    %cst_23 = arith.constant dense<0.000000e+00> : vector<8x128xf32>
    %27 = tpu.matmul %1, %26, %cst_23 {dimension_numbers = #tpu.dot_dimension_numbers<[1], [0], [0], [1], [0, 0, 1, 1], [], []>} : vector<8x128xbf16>, vector<128x128xbf16>, vector<8x128xf32> -> vector<8x128xf32>
    %28 = arith.truncf %27 : vector<8x128xf32> to vector<8x128xbf16>
    %c0_24 = arith.constant 0 : index
    %c0_25 = arith.constant 0 : index
    %29 = vector.load %arg13[%c0_24, %c0_25] : memref<128x128xbf16, #tpu.memory_space<vmem>>, vector<128x128xbf16>
    %cst_26 = arith.constant dense<0.000000e+00> : vector<8x128xf32>
    %30 = tpu.matmul %28, %29, %cst_26 {dimension_numbers = #tpu.dot_dimension_numbers<[1], [0], [0], [1], [0, 0, 1, 1], [], []>} : vector<8x128xbf16>, vector<128x128xbf16>, vector<8x128xf32> -> vector<8x128xf32>
    %c0_27 = arith.constant 0 : index
    %c0_28 = arith.constant 0 : index
    %31 = vector.load %arg14[%c0_27, %c0_28] : memref<1x128xf32, #tpu.memory_space<vmem>>, vector<1x128xf32>
    %32 = vector.broadcast %31 : vector<1x128xf32> to vector<8x128xf32>
    %33 = arith.addf %30, %32 : vector<8x128xf32>
    %34 = arith.addf %9, %33 : vector<8x128xf32>
    %cst_29 = arith.constant dense<0.000000e+00> : vector<128x128xf32>
    %35 = tpu.matmul %0, %26, %cst_29 {dimension_numbers = #tpu.dot_dimension_numbers<[1], [0], [0], [1], [0, 0, 1, 1], [], []>} : vector<128x128xbf16>, vector<128x128xbf16>, vector<128x128xf32> -> vector<128x128xf32>
    %36 = arith.truncf %35 : vector<128x128xf32> to vector<128x128xbf16>
    %c0_30 = arith.constant 0 : index
    %c0_31 = arith.constant 0 : index
    %37 = vector.load %arg7[%c0_30, %c0_31] : memref<128x128xbf16, #tpu.memory_space<vmem>>, vector<128x128xbf16>
    %cst_32 = arith.constant dense<0.000000e+00> : vector<128x128xf32>
    %38 = tpu.matmul %36, %37, %cst_32 {dimension_numbers = #tpu.dot_dimension_numbers<[1], [0], [0], [1], [0, 0, 1, 1], [], []>} : vector<128x128xbf16>, vector<128x128xbf16>, vector<128x128xf32> -> vector<128x128xf32>
    %c0_33 = arith.constant 0 : index
    %c0_34 = arith.constant 0 : index
    %39 = vector.load %arg8[%c0_33, %c0_34] : memref<128x128xf32, #tpu.memory_space<vmem>>, vector<128x128xf32>
    %40 = arith.addf %38, %39 : vector<128x128xf32>
    %cst_35 = arith.constant 0.000000e+00 : f32
    %41 = vector.broadcast %cst_35 : f32 to vector<128x128xf32>
    %42 = arith.maximumf %40, %41 : vector<128x128xf32>
    %43 = arith.truncf %42 : vector<128x128xf32> to vector<128x128xbf16>
    %c0_36 = arith.constant 0 : index
    %c0_37 = arith.constant 0 : index
    %44 = vector.load %arg9[%c0_36, %c0_37] : memref<128x128xbf16, #tpu.memory_space<vmem>>, vector<128x128xbf16>
    %cst_38 = arith.constant dense<0.000000e+00> : vector<128x128xf32>
    %45 = tpu.matmul %43, %44, %cst_38 {dimension_numbers = #tpu.dot_dimension_numbers<[1], [0], [0], [1], [0, 0, 1, 1], [], []>} : vector<128x128xbf16>, vector<128x128xbf16>, vector<128x128xf32> -> vector<128x128xf32>
    %c0_39 = arith.constant 0 : index
    %c0_40 = arith.constant 0 : index
    %46 = vector.load %arg10[%c0_39, %c0_40] : memref<1x128xf32, #tpu.memory_space<vmem>>, vector<1x128xf32>
    %47 = vector.broadcast %46 : vector<1x128xf32> to vector<128x128xf32>
    %48 = arith.addf %45, %47 : vector<128x128xf32>
    %cst_41 = arith.constant 0.000000e+00 : f32
    %49 = vector.broadcast %cst_41 : f32 to vector<128x128xf32>
    %50 = arith.maximumf %48, %49 : vector<128x128xf32>
    %51 = arith.truncf %50 : vector<128x128xf32> to vector<128x128xbf16>
    %cst_42 = arith.constant dense<0.000000e+00> : vector<8x128xf32>
    %52 = tpu.matmul %1, %51, %cst_42 {dimension_numbers = #tpu.dot_dimension_numbers<[1], [0], [0], [1], [0, 0, 1, 1], [], []>} : vector<8x128xbf16>, vector<128x128xbf16>, vector<8x128xf32> -> vector<8x128xf32>
    %53 = arith.truncf %52 : vector<8x128xf32> to vector<8x128xbf16>
    %c0_43 = arith.constant 0 : index
    %c0_44 = arith.constant 0 : index
    %54 = vector.load %arg15[%c0_43, %c0_44] : memref<128x128xbf16, #tpu.memory_space<vmem>>, vector<128x128xbf16>
    %cst_45 = arith.constant dense<0.000000e+00> : vector<8x128xf32>
    %55 = tpu.matmul %53, %54, %cst_45 {dimension_numbers = #tpu.dot_dimension_numbers<[1], [0], [0], [1], [0, 0, 1, 1], [], []>} : vector<8x128xbf16>, vector<128x128xbf16>, vector<8x128xf32> -> vector<8x128xf32>
    %c0_46 = arith.constant 0 : index
    %c0_47 = arith.constant 0 : index
    %56 = vector.load %arg16[%c0_46, %c0_47] : memref<1x128xf32, #tpu.memory_space<vmem>>, vector<1x128xf32>
    %57 = vector.broadcast %56 : vector<1x128xf32> to vector<8x128xf32>
    %58 = arith.addf %55, %57 : vector<8x128xf32>
    %59 = arith.addf %34, %58 : vector<8x128xf32>
    %c0_48 = arith.constant 0 : index
    %c0_49 = arith.constant 0 : index
    %60 = vector.load %arg17[%c0_48, %c0_49] : memref<8x128xf32, #tpu.memory_space<vmem>>, vector<8x128xf32>
    tpu.vector_store %arg17[%c0_48, %c0_49], %59 {strides = array<i32>} : memref<8x128xf32, #tpu.memory_space<vmem>>, vector<8x128xf32>,
    return
  }
}

</mosaic_0001>

<llo_original>
// kernel: graphegin_forward.1
$region0: #{graphegin_forward.1}
  #allocation0 [shape = 'u32[]', space=smem, size = 0x4, offset = 0x4, fixed_abs, tag = 'smem constant byte address 0x4 - core index']
  #allocation1 [shape = 'u32[144,128]{1,0:T(1,128)}', space=vmem, size = 0x12000, scoped, tag = 'internal scratch']
  %s0 = inlined_call_operand.vmem [shape: bf16[128,128], index: 0, kind: input, shape index: {}]
  %s1 = inlined_call_operand.vmem [shape: bf16[128,128], index: 1, kind: input, shape index: {}]
  %s2 = inlined_call_operand.vmem [shape: bf16[8,128], index: 2, kind: input, shape index: {}]
  %s3 = inlined_call_operand.vmem [shape: bf16[128,128], index: 3, kind: input, shape index: {}]
  %s4 = inlined_call_operand.vmem [shape: f32[128,128], index: 4, kind: input, shape index: {}]
  %s5 = inlined_call_operand.vmem [shape: bf16[128,128], index: 5, kind: input, shape index: {}]
  %s6 = inlined_call_operand.vmem [shape: f32[1,128], index: 6, kind: input, shape index: {}]
  %s7 = inlined_call_operand.vmem [shape: bf16[128,128], index: 7, kind: input, shape index: {}]
  %s8 = inlined_call_operand.vmem [shape: f32[128,128], index: 8, kind: input, shape index: {}]
  %s9 = inlined_call_operand.vmem [shape: bf16[128,128], index: 9, kind: input, shape index: {}]
  %s10 = inlined_call_operand.vmem [shape: f32[1,128], index: 10, kind: input, shape index: {}]
  %s11 = inlined_call_operand.vmem [shape: bf16[128,128], index: 11, kind: input, shape index: {}]
  %s12 = inlined_call_operand.vmem [shape: f32[1,128], index: 12, kind: input, shape index: {}]
  %s13 = inlined_call_operand.vmem [shape: bf16[128,128], index: 13, kind: input, shape index: {}]
  %s14 = inlined_call_operand.vmem [shape: f32[1,128], index: 14, kind: input, shape index: {}]
  %s15 = inlined_call_operand.vmem [shape: bf16[128,128], index: 15, kind: input, shape index: {}]
  %s16 = inlined_call_operand.vmem [shape: f32[1,128], index: 16, kind: input, shape index: {}]
  %s17 = inlined_call_operand.vmem [shape: f32[8,128], index: 17, kind: output, shape index: {}]
  %s18 = sld [smem:[#allocation0]]
  $region78: #{graphegin_forward.1} parent=0
    _
  %s20 = ssub.s32 1, %s18
  %s21 = scalar_select 0, %s20, %s18
  // Predicated region
  $region2: #{graphegin_forward.1} parent=0 // pred_check
    _
  $region3: #{graphegin_forward.1} parent=0 // pred_check_branch
    %23 = sbr.rel (0) target = $region5
  $region4: #{graphegin_forward.1} parent=0 // pred_region
    _
  $region5: #{graphegin_forward.1} parent=0 // pred_fallthru
    _
  // Predicated region
  $region6: #{graphegin_forward.1} parent=0 // pred_check
    _
  $region7: #{graphegin_forward.1} parent=0 // pred_check_branch
    %25 = sbr.rel (0) target = $region9
  $region8: #{graphegin_forward.1} parent=0 // pred_region
    _
  $region9: #{graphegin_forward.1} parent=0 // pred_fallthru
    _
  // Predicated region
  $region10: #{graphegin_forward.1} parent=0 // pred_check
    _
  $region11: #{graphegin_forward.1} parent=0 // pred_check_branch
    %27 = sbr.rel (0) target = $region13
  $region12: #{graphegin_forward.1} parent=0 // pred_region
    _
  $region13: #{graphegin_forward.1} parent=0 // pred_fallthru
    _
  // Predicated region
  $region14: #{graphegin_forward.1} parent=0 // pred_check
    _
  $region15: #{graphegin_forward.1} parent=0 // pred_check_branch
    %29 = sbr.rel (0) target = $region17
  $region16: #{graphegin_forward.1} parent=0 // pred_region
    _
  $region17: #{graphegin_forward.1} parent=0 // pred_fallthru
    _
  // Predicated region
  $region18: #{graphegin_forward.1} parent=0 // pred_check
    _
  $region19: #{graphegin_forward.1} parent=0 // pred_check_branch
    %31 = sbr.rel (0) target = $region21
  $region20: #{graphegin_forward.1} parent=0 // pred_region
    _
  $region21: #{graphegin_forward.1} parent=0 // pred_fallthru
    _
  // Predicated region
  $region22: #{graphegin_forward.1} parent=0 // pred_check
    _
  $region23: #{graphegin_forward.1} parent=0 // pred_check_branch
    %33 = sbr.rel (0) target = $region25
  $region24: #{graphegin_forward.1} parent=0 // pred_region
    _
  $region25: #{graphegin_forward.1} parent=0 // pred_fallthru
    _
  // Predicated region
  $region26: #{graphegin_forward.1} parent=0 // pred_check
    _
  $region27: #{graphegin_forward.1} parent=0 // pred_check_branch
    %35 = sbr.rel (0) target = $region29
  $region28: #{graphegin_forward.1} parent=0 // pred_region
    _
  $region29: #{graphegin_forward.1} parent=0 // pred_fallthru
    _
  // Predicated region
  $region30: #{graphegin_forward.1} parent=0 // pred_check
    _
  $region31: #{graphegin_forward.1} parent=0 // pred_check_branch
    %37 = sbr.rel (0) target = $region33
  $region32: #{graphegin_forward.1} parent=0 // pred_region
    _
  $region33: #{graphegin_forward.1} parent=0 // pred_fallthru
    _
  // Predicated region
  $region34: #{graphegin_forward.1} parent=0 // pred_check
    _
  $region35: #{graphegin_forward.1} parent=0 // pred_check_branch
    %39 = sbr.rel (0) target = $region37
  $region36: #{graphegin_forward.1} parent=0 // pred_region
    _
  $region37: #{graphegin_forward.1} parent=0 // pred_fallthru
    _
  // Predicated region
  $region38: #{graphegin_forward.1} parent=0 // pred_check
    _
  $region39: #{graphegin_forward.1} parent=0 // pred_check_branch
    %41 = sbr.rel (0) target = $region41
  $region40: #{graphegin_forward.1} parent=0 // pred_region
    _
  $region41: #{graphegin_forward.1} parent=0 // pred_fallthru
    _
  // Predicated region
  $region42: #{graphegin_forward.1} parent=0 // pred_check
    _
  $region43: #{graphegin_forward.1} parent=0 // pred_check_branch
    %43 = sbr.rel (0) target = $region45
  $region44: #{graphegin_forward.1} parent=0 // pred_region
    _
  $region45: #{graphegin_forward.1} parent=0 // pred_fallthru
    _
  // Predicated region
  $region46: #{graphegin_forward.1} parent=0 // pred_check
    _
  $region47: #{graphegin_forward.1} parent=0 // pred_check_branch
    %45 = sbr.rel (0) target = $region49
  $region48: #{graphegin_forward.1} parent=0 // pred_region
    _
  $region49: #{graphegin_forward.1} parent=0 // pred_fallthru
    _
  // Predicated region
  $region50: #{graphegin_forward.1} parent=0 // pred_check
    _
  $region51: #{graphegin_forward.1} parent=0 // pred_check_branch
    %47 = sbr.rel (0) target = $region53
  $region52: #{graphegin_forward.1} parent=0 // pred_region
    _
  $region53: #{graphegin_forward.1} parent=0 // pred_fallthru
    _
  // Predicated region
  $region54: #{graphegin_forward.1} parent=0 // pred_check
    _
  $region55: #{graphegin_forward.1} parent=0 // pred_check_branch
    %49 = sbr.rel (0) target = $region57
  $region56: #{graphegin_forward.1} parent=0 // pred_region
    _
  $region57: #{graphegin_forward.1} parent=0 // pred_fallthru
    _
  // Predicated region
  $region58: #{graphegin_forward.1} parent=0 // pred_check
    _
  $region59: #{graphegin_forward.1} parent=0 // pred_check_branch
    %51 = sbr.rel (0) target = $region61
  $region60: #{graphegin_forward.1} parent=0 // pred_region
    _
  $region61: #{graphegin_forward.1} parent=0 // pred_fallthru
    _
  // Predicated region
  $region62: #{graphegin_forward.1} parent=0 // pred_check
    _
  $region63: #{graphegin_forward.1} parent=0 // pred_check_branch
    %53 = sbr.rel (0) target = $region65
  $region64: #{graphegin_forward.1} parent=0 // pred_region
    _
  $region65: #{graphegin_forward.1} parent=0 // pred_fallthru
    _
  // Predicated region
  $region66: #{graphegin_forward.1} parent=0 // pred_check
    _
  $region67: #{graphegin_forward.1} parent=0 // pred_check_branch
    %55 = sbr.rel (0) target = $region69
  $region68: #{graphegin_forward.1} parent=0 // pred_region
    _
  $region69: #{graphegin_forward.1} parent=0 // pred_fallthru
    _
  %v57 = vld [vmem:[%s1] sm:$0xf]
  %v58 = vld [vmem:[%s1 + $0x4] sm:$0xf]
  %v59 = vld [vmem:[%s1 + $0x8] sm:$0xf]
  %v60 = vld [vmem:[%s1 + $0xc] sm:$0xf]
  %v61 = vld [vmem:[%s1 + $0x10] sm:$0xf]
  %v62 = vld [vmem:[%s1 + $0x14] sm:$0xf]
  %v63 = vld [vmem:[%s1 + $0x18] sm:$0xf]
  %v64 = vld [vmem:[%s1 + $0x1c] sm:$0xf]
  %v65 = vld [vmem:[%s1 + $0x20] sm:$0xf]
  %v66 = vld [vmem:[%s1 + $0x24] sm:$0xf]
  %v67 = vld [vmem:[%s1 + $0x28] sm:$0xf]
  %v68 = vld [vmem:[%s1 + $0x2c] sm:$0xf]
  %v69 = vld [vmem:[%s1 + $0x30] sm:$0xf]
  %v70 = vld [vmem:[%s1 + $0x34] sm:$0xf]
  %v71 = vld [vmem:[%s1 + $0x38] sm:$0xf]
  %v72 = vld [vmem:[%s1 + $0x3c] sm:$0xf]
  %v73 = vld [vmem:[%s2] sm:$0xf]
  %v74 = vld [vmem:[%s0] sm:$0xf]
  %v75 = vld [vmem:[%s0 + $0x4] sm:$0xf]
  %v76 = vld [vmem:[%s0 + $0x8] sm:$0xf]
  %v77 = vld [vmem:[%s0 + $0xc] sm:$0xf]
  %v78 = vld [vmem:[%s0 + $0x10] sm:$0xf]
  %v79 = vld [vmem:[%s0 + $0x14] sm:$0xf]
  %v80 = vld [vmem:[%s0 + $0x18] sm:$0xf]
  %v81 = vld [vmem:[%s0 + $0x1c] sm:$0xf]
  %v82 = vld [vmem:[%s0 + $0x20] sm:$0xf]
  %v83 = vld [vmem:[%s0 + $0x24] sm:$0xf]
  %v84 = vld [vmem:[%s0 + $0x28] sm:$0xf]
  %v85 = vld [vmem:[%s0 + $0x2c] sm:$0xf]
  %v86 = vld [vmem:[%s0 + $0x30] sm:$0xf]
  %v87 = vld [vmem:[%s0 + $0x34] sm:$0xf]
  %v88 = vld [vmem:[%s0 + $0x38] sm:$0xf]
  %v89 = vld [vmem:[%s0 + $0x3c] sm:$0xf]
  %v106 = vunpack.c.l.b16 %v74
  %v107 = vunpack.c.l.b16 %v75
  %v108 = vunpack.c.l.b16 %v76
  %v109 = vunpack.c.l.b16 %v77
  %v110 = vunpack.c.l.b16 %v78
  %v111 = vunpack.c.l.b16 %v79
  %v112 = vunpack.c.l.b16 %v80
  %v113 = vunpack.c.l.b16 %v81
  %v114 = vunpack.c.l.b16 %v82
  %v115 = vunpack.c.l.b16 %v83
  %v116 = vunpack.c.l.b16 %v84
  %v117 = vunpack.c.l.b16 %v85
  %v118 = vunpack.c.l.b16 %v86
  %v119 = vunpack.c.l.b16 %v87
  %v120 = vunpack.c.l.b16 %v88
  %v121 = vunpack.c.l.b16 %v89
  %v122 = vpack.c.b16 %v107, %v106
  %v123 = vpack.c.b16 %v109, %v108
  %v124 = vpack.c.b16 %v111, %v110
  %v125 = vpack.c.b16 %v113, %v112
  %v126 = vpack.c.b16 %v115, %v114
  %v127 = vpack.c.b16 %v117, %v116
  %v128 = vpack.c.b16 %v119, %v118
  %v129 = vpack.c.b16 %v121, %v120
  %138 = vmatprep.subr.bf16.mxu0 0
  %139 = vmatpush1.bf16.msra.mxu0 %v129
  %140 = vmatprep.subr.bf16.mxu0 0
  %141 = vmatpush1.bf16.msra.mxu0 %v128
  %142 = vmatprep.subr.bf16.mxu0 0
  %143 = vmatpush1.bf16.msra.mxu0 %v127
  %144 = vmatprep.subr.bf16.mxu0 0
  %145 = vmatpush1.bf16.msra.mxu0 %v126
  %146 = vmatprep.subr.bf16.mxu0 0
  %147 = vmatpush1.bf16.msra.mxu0 %v125
  %148 = vmatprep.subr.bf16.mxu0 0
  %149 = vmatpush1.bf16.msra.mxu0 %v124
  %150 = vmatprep.subr.bf16.mxu0 0
  %151 = vmatpush1.bf16.msra.mxu0 %v123
  %152 = vmatprep.subr.bf16.mxu0 0
  %153 = vmatpush1.bf16.msra.mxu0 %v122
  %154 = vmatprep.subr.bf16.mxu0 0
  %155 = vmatpush2.bf16.msra.mxu0 0
  %156 = vmatprep.subr.bf16.mxu0 0
  %157 = vmatpush2.bf16.msra.mxu0 0
  %158 = vmatprep.subr.bf16.mxu0 0
  %159 = vmatpush2.bf16.msra.mxu0 0
  %160 = vmatprep.subr.bf16.mxu0 0
  %161 = vmatpush2.bf16.msra.mxu0 0
  %162 = vmatprep.subr.bf16.mxu0 0
  %163 = vmatpush2.bf16.msra.mxu0 0
  %164 = vmatprep.subr.bf16.mxu0 0
  %165 = vmatpush2.bf16.msra.mxu0 0
  %166 = vmatprep.subr.bf16.mxu0 0
  %167 = vmatpush2.bf16.msra.mxu0 0
  %168 = vmatprep.subr.bf16.mxu0 0
  %169 = vmatpush2.bf16.msra.mxu0 0
  %170 = vmatprep.mubr.bf16.mxu0 0
  %171 = vmatmul.mubr.bf16.gmra.mxu0 %v73
  %v172 = vpop.f32.mrf.mxu0
  %v173 = vadd.f32 0.0, %v172
  %v174 = vpop.f32.mrf.mxu0
  %v175 = vpop.f32.mrf.mxu0
  %v176 = vpop.f32.mrf.mxu0
  %177 = vdwg.mxu0
  %v178 = vpack.c.bf16 %v173, %v173
  %v179 = vld [vmem:[%s11] sm:$0xf]
  %v180 = vld [vmem:[%s11 + $0x4] sm:$0xf]
  %v181 = vld [vmem:[%s11 + $0x8] sm:$0xf]
  %v182 = vld [vmem:[%s11 + $0xc] sm:$0xf]
  %v183 = vld [vmem:[%s11 + $0x10] sm:$0xf]
  %v184 = vld [vmem:[%s11 + $0x14] sm:$0xf]
  %v185 = vld [vmem:[%s11 + $0x18] sm:$0xf]
  %v186 = vld [vmem:[%s11 + $0x1c] sm:$0xf]
  %v187 = vld [vmem:[%s11 + $0x20] sm:$0xf]
  %v188 = vld [vmem:[%s11 + $0x24] sm:$0xf]
  %v189 = vld [vmem:[%s11 + $0x28] sm:$0xf]
  %v190 = vld [vmem:[%s11 + $0x2c] sm:$0xf]
  %v191 = vld [vmem:[%s11 + $0x30] sm:$0xf]
  %v192 = vld [vmem:[%s11 + $0x34] sm:$0xf]
  %v193 = vld [vmem:[%s11 + $0x38] sm:$0xf]
  %v194 = vld [vmem:[%s11 + $0x3c] sm:$0xf]
  %v195 = vld [vmem:[%s12] sm:$0x1]
  %v197 = vlaneseq
  %v198 = vshrl.u32 %v197, 7
  %v199 = vsub.s32 0, %v198
  %v200 = vrot.slane %v195, %v199
  %v218 = vunpack.c.l.b16 %v179
  %v219 = vunpack.c.l.b16 %v180
  %v220 = vunpack.c.l.b16 %v181
  %v221 = vunpack.c.l.b16 %v182
  %v222 = vunpack.c.l.b16 %v183
  %v223 = vunpack.c.l.b16 %v184
  %v224 = vunpack.c.l.b16 %v185
  %v225 = vunpack.c.l.b16 %v186
  %v226 = vunpack.c.l.b16 %v187
  %v227 = vunpack.c.l.b16 %v188
  %v228 = vunpack.c.l.b16 %v189
  %v229 = vunpack.c.l.b16 %v190
  %v230 = vunpack.c.l.b16 %v191
  %v231 = vunpack.c.l.b16 %v192
  %v232 = vunpack.c.l.b16 %v193
  %v233 = vunpack.c.l.b16 %v194
  %v234 = vpack.c.b16 %v219, %v218
  %v235 = vpack.c.b16 %v221, %v220
  %v236 = vpack.c.b16 %v223, %v222
  %v237 = vpack.c.b16 %v225, %v224
  %v238 = vpack.c.b16 %v227, %v226
  %v239 = vpack.c.b16 %v229, %v228
  %v240 = vpack.c.b16 %v231, %v230
  %v241 = vpack.c.b16 %v233, %v232
  %250 = vmatprep.subr.bf16.mxu0 0
  %251 = vmatpush1.bf16.msra.mxu0 %v241
  %252 = vmatprep.subr.bf16.mxu0 0
  %253 = vmatpush1.bf16.msra.mxu0 %v240
  %254 = vmatprep.subr.bf16.mxu0 0
  %255 = vmatpush1.bf16.msra.mxu0 %v239
  %256 = vmatprep.subr.bf16.mxu0 0
  %257 = vmatpush1.bf16.msra.mxu0 %v238
  %258 = vmatprep.subr.bf16.mxu0 0
  %259 = vmatpush1.bf16.msra.mxu0 %v237
  %260 = vmatprep.subr.bf16.mxu0 0
  %261 = vmatpush1.bf16.msra.mxu0 %v236
  %262 = vmatprep.subr.bf16.mxu0 0
  %263 = vmatpush1.bf16.msra.mxu0 %v235
  %264 = vmatprep.subr.bf16.mxu0 0
  %265 = vmatpush1.bf16.msra.mxu0 %v234
  %266 = vmatprep.subr.bf16.mxu0 0
  %267 = vmatpush2.bf16.msra.mxu0 0
  %268 = vmatprep.subr.bf16.mxu0 0
  %269 = vmatpush2.bf16.msra.mxu0 0
  %270 = vmatprep.subr.bf16.mxu0 0
  %271 = vmatpush2.bf16.msra.mxu0 0
  %272 = vmatprep.subr.bf16.mxu0 0
  %273 = vmatpush2.bf16.msra.mxu0 0
  %274 = vmatprep.subr.bf16.mxu0 0
  %275 = vmatpush2.bf16.msra.mxu0 0
  %276 = vmatprep.subr.bf16.mxu0 0
  %277 = vmatpush2.bf16.msra.mxu0 0
  %278 = vmatprep.subr.bf16.mxu0 0
  %279 = vmatpush2.bf16.msra.mxu0 0
  %280 = vmatprep.subr.bf16.mxu0 0
  %281 = vmatpush2.bf16.msra.mxu0 0
  %282 = vmatprep.mubr.bf16.mxu0 0
  %283 = vmatmul.mubr.bf16.gmra.mxu0 %v178
  %v284 = vpop.f32.mrf.mxu0
  %v285 = vadd.f32 %v200, %v284
  %v286 = vpop.f32.mrf.mxu0
  %v287 = vpop.f32.mrf.mxu0
  %v288 = vpop.f32.mrf.mxu0
  %289 = vdwg.mxu0
  %v306 = vunpack.c.l.b16 %v57
  %v307 = vunpack.c.l.b16 %v58
  %v308 = vunpack.c.l.b16 %v59
  %v309 = vunpack.c.l.b16 %v60
  %v310 = vunpack.c.l.b16 %v61
  %v311 = vunpack.c.l.b16 %v62
  %v312 = vunpack.c.l.b16 %v63
  %v313 = vunpack.c.l.b16 %v64
  %v314 = vunpack.c.l.b16 %v65
  %v315 = vunpack.c.l.b16 %v66
  %v316 = vunpack.c.l.b16 %v67
  %v317 = vunpack.c.l.b16 %v68
  %v318 = vunpack.c.l.b16 %v69
  %v319 = vunpack.c.l.b16 %v70
  %v320 = vunpack.c.l.b16 %v71
  %v321 = vunpack.c.l.b16 %v72
  %v322 = vpack.c.b16 %v307, %v306
  %v323 = vpack.c.b16 %v309, %v308
  %v324 = vpack.c.b16 %v311, %v310
  %v325 = vpack.c.b16 %v313, %v312
  %v326 = vpack.c.b16 %v315, %v314
  %v327 = vpack.c.b16 %v317, %v316
  %v328 = vpack.c.b16 %v319, %v318
  %v329 = vpack.c.b16 %v321, %v320
  %338 = vmatprep.subr.bf16.mxu0 0
  %339 = vmatpush1.bf16.msra.mxu0 %v129
  %340 = vmatprep.subr.bf16.mxu0 0
  %341 = vmatpush1.bf16.msra.mxu0 %v128
  %342 = vmatprep.subr.bf16.mxu0 0
  %343 = vmatpush1.bf16.msra.mxu0 %v127
  %344 = vmatprep.subr.bf16.mxu0 0
  %345 = vmatpush1.bf16.msra.mxu0 %v126
  %346 = vmatprep.subr.bf16.mxu0 0
  %347 = vmatpush1.bf16.msra.mxu0 %v125
  %348 = vmatprep.subr.bf16.mxu0 0
  %349 = vmatpush1.bf16.msra.mxu0 %v124
  %350 = vmatprep.subr.bf16.mxu0 0
  %351 = vmatpush1.bf16.msra.mxu0 %v123
  %352 = vmatprep.subr.bf16.mxu0 0
  %353 = vmatpush1.bf16.msra.mxu0 %v122
  %354 = vmatprep.subr.bf16.mxu0 0
  %355 = vmatpush2.bf16.msra.mxu0 0
  %356 = vmatprep.subr.bf16.mxu0 0
  %357 = vmatpush2.bf16.msra.mxu0 0
  %358 = vmatprep.subr.bf16.mxu0 0
  %359 = vmatpush2.bf16.msra.mxu0 0
  %360 = vmatprep.subr.bf16.mxu0 0
  %361 = vmatpush2.bf16.msra.mxu0 0
  %362 = vmatprep.subr.bf16.mxu0 0
  %363 = vmatpush2.bf16.msra.mxu0 0
  %364 = vmatprep.subr.bf16.mxu0 0
  %365 = vmatpush2.bf16.msra.mxu0 0
  %366 = vmatprep.subr.bf16.mxu0 0
  %367 = vmatpush2.bf16.msra.mxu0 0
  %368 = vmatprep.subr.bf16.mxu0 0
  %369 = vmatpush2.bf16.msra.mxu0 0
  %370 = vmatprep.mubr.bf16.mxu0 0
  %371 = vmatmul.mubr.bf16.gmra.mxu0 %v322
  %v372 = vpop.f32.mrf.mxu0
  %v373 = vadd.f32 0.0, %v372
  %v374 = vpop.f32.mrf.mxu0
  %v375 = vpop.f32.mrf.mxu0
  %v376 = vadd.f32 0.0, %v375
  %v377 = vpop.f32.mrf.mxu0
  %378 = vmatprep.mubr.bf16.mxu0 0
  %379 = vmatmul.mubr.bf16.gmra.mxu0 %v323
  %v380 = vpop.f32.mrf.mxu0
  %v381 = vadd.f32 0.0, %v380
  %v382 = vpop.f32.mrf.mxu0
  %v383 = vpop.f32.mrf.mxu0
  %v384 = vadd.f32 0.0, %v383
  %v385 = vpop.f32.mrf.mxu0
  %386 = vmatprep.mubr.bf16.mxu0 0
  %387 = vmatmul.mubr.bf16.gmra.mxu0 %v324
  %v388 = vpop.f32.mrf.mxu0
  %v389 = vadd.f32 0.0, %v388
  %v390 = vpop.f32.mrf.mxu0
  %v391 = vpop.f32.mrf.mxu0
  %v392 = vadd.f32 0.0, %v391
  %v393 = vpop.f32.mrf.mxu0
  %394 = vmatprep.mubr.bf16.mxu0 0
  %395 = vmatmul.mubr.bf16.gmra.mxu0 %v325
  %v396 = vpop.f32.mrf.mxu0
  %v397 = vadd.f32 0.0, %v396
  %v398 = vpop.f32.mrf.mxu0
  %v399 = vpop.f32.mrf.mxu0
  %v400 = vadd.f32 0.0, %v399
  %v401 = vpop.f32.mrf.mxu0
  %402 = vmatprep.mubr.bf16.mxu0 0
  %403 = vmatmul.mubr.bf16.gmra.mxu0 %v326
  %v404 = vpop.f32.mrf.mxu0
  %v405 = vadd.f32 0.0, %v404
  %v406 = vpop.f32.mrf.mxu0
  %v407 = vpop.f32.mrf.mxu0
  %v408 = vadd.f32 0.0, %v407
  %v409 = vpop.f32.mrf.mxu0
  %410 = vmatprep.mubr.bf16.mxu0 0
  %411 = vmatmul.mubr.bf16.gmra.mxu0 %v327
  %v412 = vpop.f32.mrf.mxu0
  %v413 = vadd.f32 0.0, %v412
  %v414 = vpop.f32.mrf.mxu0
  %v415 = vpop.f32.mrf.mxu0
  %v416 = vadd.f32 0.0, %v415
  %v417 = vpop.f32.mrf.mxu0
  %418 = vmatprep.mubr.bf16.mxu0 0
  %419 = vmatmul.mubr.bf16.gmra.mxu0 %v328
  %v420 = vpop.f32.mrf.mxu0
  %v421 = vadd.f32 0.0, %v420
  %v422 = vpop.f32.mrf.mxu0
  %v423 = vpop.f32.mrf.mxu0
  %v424 = vadd.f32 0.0, %v423
  %v425 = vpop.f32.mrf.mxu0
  %426 = vmatprep.mubr.bf16.mxu0 0
  %427 = vmatmul.mubr.bf16.gmra.mxu0 %v329
  %v428 = vpop.f32.mrf.mxu0
  %v429 = vadd.f32 0.0, %v428
  %v430 = vpop.f32.mrf.mxu0
  %v431 = vpop.f32.mrf.mxu0
  %v432 = vadd.f32 0.0, %v431
  %v433 = vpop.f32.mrf.mxu0
  %434 = vdwg.mxu0
  %v435 = vpack.c.bf16 %v376, %v373
  %v436 = vpack.c.bf16 %v384, %v381
  %v437 = vpack.c.bf16 %v392, %v389
  %v438 = vpack.c.bf16 %v400, %v397
  %v439 = vpack.c.bf16 %v408, %v405
  %v440 = vpack.c.bf16 %v416, %v413
  %v441 = vpack.c.bf16 %v424, %v421
  %v442 = vpack.c.bf16 %v432, %v429
  %v443 = vld [vmem:[%s3] sm:$0xf]
  %v444 = vld [vmem:[%s3 + $0x4] sm:$0xf]
  %v445 = vld [vmem:[%s3 + $0x8] sm:$0xf]
  %v446 = vld [vmem:[%s3 + $0xc] sm:$0xf]
  %v447 = vld [vmem:[%s3 + $0x10] sm:$0xf]
  %v448 = vld [vmem:[%s3 + $0x14] sm:$0xf]
  %v449 = vld [vmem:[%s3 + $0x18] sm:$0xf]
  %v450 = vld [vmem:[%s3 + $0x1c] sm:$0xf]
  %v451 = vld [vmem:[%s3 + $0x20] sm:$0xf]
  %v452 = vld [vmem:[%s3 + $0x24] sm:$0xf]
  %v453 = vld [vmem:[%s3 + $0x28] sm:$0xf]
  %v454 = vld [vmem:[%s3 + $0x2c] sm:$0xf]
  %v455 = vld [vmem:[%s3 + $0x30] sm:$0xf]
  %v456 = vld [vmem:[%s3 + $0x34] sm:$0xf]
  %v457 = vld [vmem:[%s3 + $0x38] sm:$0xf]
  %v458 = vld [vmem:[%s3 + $0x3c] sm:$0xf]
  %v459 = vld [vmem:[%s4] sm:$0xff]
  %v460 = vld [vmem:[%s4 + $0x8] sm:$0xff]
  %v461 = vld [vmem:[%s4 + $0x10] sm:$0xff]
  %v462 = vld [vmem:[%s4 + $0x18] sm:$0xff]
  %v463 = vld [vmem:[%s4 + $0x20] sm:$0xff]
  %v464 = vld [vmem:[%s4 + $0x28] sm:$0xff]
  %v465 = vld [vmem:[%s4 + $0x30] sm:$0xff]
  %v466 = vld [vmem:[%s4 + $0x38] sm:$0xff]
  %v467 = vld [vmem:[%s4 + $0x40] sm:$0xff]
  %v468 = vld [vmem:[%s4 + $0x48] sm:$0xff]
  %v469 = vld [vmem:[%s4 + $0x50] sm:$0xff]
  %v470 = vld [vmem:[%s4 + $0x58] sm:$0xff]
  %v471 = vld [vmem:[%s4 + $0x60] sm:$0xff]
  %v472 = vld [vmem:[%s4 + $0x68] sm:$0xff]
  %v473 = vld [vmem:[%s4 + $0x70] sm:$0xff]
  %v474 = vld [vmem:[%s4 + $0x78] sm:$0xff]
  %v491 = vunpack.c.l.b16 %v443
  %v492 = vunpack.c.l.b16 %v444
  %v493 = vunpack.c.l.b16 %v445
  %v494 = vunpack.c.l.b16 %v446
  %v495 = vunpack.c.l.b16 %v447
  %v496 = vunpack.c.l.b16 %v448
  %v497 = vunpack.c.l.b16 %v449
  %v498 = vunpack.c.l.b16 %v450
  %v499 = vunpack.c.l.b16 %v451
  %v500 = vunpack.c.l.b16 %v452
  %v501 = vunpack.c.l.b16 %v453
  %v502 = vunpack.c.l.b16 %v454
  %v503 = vunpack.c.l.b16 %v455
  %v504 = vunpack.c.l.b16 %v456
  %v505 = vunpack.c.l.b16 %v457
  %v506 = vunpack.c.l.b16 %v458
  %v507 = vpack.c.b16 %v492, %v491
  %v508 = vpack.c.b16 %v494, %v493
  %v509 = vpack.c.b16 %v496, %v495
  %v510 = vpack.c.b16 %v498, %v497
  %v511 = vpack.c.b16 %v500, %v499
  %v512 = vpack.c.b16 %v502, %v501
  %v513 = vpack.c.b16 %v504, %v503
  %v514 = vpack.c.b16 %v506, %v505
  %523 = vmatprep.subr.bf16.mxu0 0
  %524 = vmatpush1.bf16.msra.mxu0 %v514
  %525 = vmatprep.subr.bf16.mxu0 0
  %526 = vmatpush1.bf16.msra.mxu0 %v513
  %527 = vmatprep.subr.bf16.mxu0 0
  %528 = vmatpush1.bf16.msra.mxu0 %v512
  %529 = vmatprep.subr.bf16.mxu0 0
  %530 = vmatpush1.bf16.msra.mxu0 %v511
  %531 = vmatprep.subr.bf16.mxu0 0
  %532 = vmatpush1.bf16.msra.mxu0 %v510
  %533 = vmatprep.subr.bf16.mxu0 0
  %534 = vmatpush1.bf16.msra.mxu0 %v509
  %535 = vmatprep.subr.bf16.mxu0 0
  %536 = vmatpush1.bf16.msra.mxu0 %v508
  %537 = vmatprep.subr.bf16.mxu0 0
  %538 = vmatpush1.bf16.msra.mxu0 %v507
  %539 = vmatprep.subr.bf16.mxu0 0
  %540 = vmatpush2.bf16.msra.mxu0 0
  %541 = vmatprep.subr.bf16.mxu0 0
  %542 = vmatpush2.bf16.msra.mxu0 0
  %543 = vmatprep.subr.bf16.mxu0 0
  %544 = vmatpush2.bf16.msra.mxu0 0
  %545 = vmatprep.subr.bf16.mxu0 0
  %546 = vmatpush2.bf16.msra.mxu0 0
  %547 = vmatprep.subr.bf16.mxu0 0
  %548 = vmatpush2.bf16.msra.mxu0 0
  %549 = vmatprep.subr.bf16.mxu0 0
  %550 = vmatpush2.bf16.msra.mxu0 0
  %551 = vmatprep.subr.bf16.mxu0 0
  %552 = vmatpush2.bf16.msra.mxu0 0
  %553 = vmatprep.subr.bf16.mxu0 0
  %554 = vmatpush2.bf16.msra.mxu0 0
  %555 = vmatprep.mubr.bf16.mxu0 0
  %556 = vmatmul.mubr.bf16.gmra.mxu0 %v435
  %v557 = vpop.f32.mrf.mxu0
  %v558 = vadd.f32 %v459, %v557
  %v559 = vpop.f32.mrf.mxu0
  %v560 = vpop.f32.mrf.mxu0
  %v561 = vadd.f32 %v460, %v560
  %v562 = vpop.f32.mrf.mxu0
  %563 = vmatprep.mubr.bf16.mxu0 0
  %564 = vmatmul.mubr.bf16.gmra.mxu0 %v436
  %v565 = vpop.f32.mrf.mxu0
  %v566 = vadd.f32 %v461, %v565
  %v567 = vpop.f32.mrf.mxu0
  %v568 = vpop.f32.mrf.mxu0
  %v569 = vadd.f32 %v462, %v568
  %v570 = vpop.f32.mrf.mxu0
  %571 = vmatprep.mubr.bf16.mxu0 0
  %572 = vmatmul.mubr.bf16.gmra.mxu0 %v437
  %v573 = vpop.f32.mrf.mxu0
  %v574 = vadd.f32 %v463, %v573
  %v575 = vpop.f32.mrf.mxu0
  %v576 = vpop.f32.mrf.mxu0
  %v577 = vadd.f32 %v464, %v576
  %v578 = vpop.f32.mrf.mxu0
  %579 = vmatprep.mubr.bf16.mxu0 0
  %580 = vmatmul.mubr.bf16.gmra.mxu0 %v438
  %v581 = vpop.f32.mrf.mxu0
  %v582 = vadd.f32 %v465, %v581
  %v583 = vpop.f32.mrf.mxu0
  %v584 = vpop.f32.mrf.mxu0
  %v585 = vadd.f32 %v466, %v584
  %v586 = vpop.f32.mrf.mxu0
  %587 = vmatprep.mubr.bf16.mxu0 0
  %588 = vmatmul.mubr.bf16.gmra.mxu0 %v439
  %v589 = vpop.f32.mrf.mxu0
  %v590 = vadd.f32 %v467, %v589
  %v591 = vpop.f32.mrf.mxu0
  %v592 = vpop.f32.mrf.mxu0
  %v593 = vadd.f32 %v468, %v592
  %v594 = vpop.f32.mrf.mxu0
  %595 = vmatprep.mubr.bf16.mxu0 0
  %596 = vmatmul.mubr.bf16.gmra.mxu0 %v440
  %v597 = vpop.f32.mrf.mxu0
  %v598 = vadd.f32 %v469, %v597
  %v599 = vpop.f32.mrf.mxu0
  %v600 = vpop.f32.mrf.mxu0
  %v601 = vadd.f32 %v470, %v600
  %v602 = vpop.f32.mrf.mxu0
  %603 = vmatprep.mubr.bf16.mxu0 0
  %604 = vmatmul.mubr.bf16.gmra.mxu0 %v441
  %v605 = vpop.f32.mrf.mxu0
  %v606 = vadd.f32 %v471, %v605
  %v607 = vpop.f32.mrf.mxu0
  %v608 = vpop.f32.mrf.mxu0
  %v609 = vadd.f32 %v472, %v608
  %v610 = vpop.f32.mrf.mxu0
  %611 = vmatprep.mubr.bf16.mxu0 0
  %612 = vmatmul.mubr.bf16.gmra.mxu0 %v442
  %v613 = vpop.f32.mrf.mxu0
  %v614 = vadd.f32 %v473, %v613
  %v615 = vpop.f32.mrf.mxu0
  %v616 = vpop.f32.mrf.mxu0
  %v617 = vadd.f32 %v474, %v616
  %v618 = vpop.f32.mrf.mxu0
  %619 = vdwg.mxu0
  %v620 = vmax.f32 %v558, 0.0
  %v621 = vmax.f32 %v561, 0.0
  %v622 = vmax.f32 %v566, 0.0
  %v623 = vmax.f32 %v569, 0.0
  %v624 = vmax.f32 %v574, 0.0
  %v625 = vmax.f32 %v577, 0.0
  %v626 = vmax.f32 %v582, 0.0
  %v627 = vmax.f32 %v585, 0.0
  %v628 = vmax.f32 %v590, 0.0
  %v629 = vmax.f32 %v593, 0.0
  %v630 = vmax.f32 %v598, 0.0
  %v631 = vmax.f32 %v601, 0.0
  %v632 = vmax.f32 %v606, 0.0
  %v633 = vmax.f32 %v609, 0.0
  %v634 = vmax.f32 %v614, 0.0
  %v635 = vmax.f32 %v617, 0.0
  %v636 = vpack.c.bf16 %v621, %v620
  %v637 = vpack.c.bf16 %v623, %v622
  %v638 = vpack.c.bf16 %v625, %v624
  %v639 = vpack.c.bf16 %v627, %v626
  %v640 = vpack.c.bf16 %v629, %v628
  %v641 = vpack.c.bf16 %v631, %v630
  %v642 = vpack.c.bf16 %v633, %v632
  %v643 = vpack.c.bf16 %v635, %v634
  %v644 = vld [vmem:[%s5] sm:$0xf]
  %v645 = vld [vmem:[%s5 + $0x4] sm:$0xf]
  %v646 = vld [vmem:[%s5 + $0x8] sm:$0xf]
  %v647 = vld [vmem:[%s5 + $0xc] sm:$0xf]
  %v648 = vld [vmem:[%s5 + $0x10] sm:$0xf]
  %v649 = vld [vmem:[%s5 + $0x14] sm:$0xf]
  %v650 = vld [vmem:[%s5 + $0x18] sm:$0xf]
  %v651 = vld [vmem:[%s5 + $0x1c] sm:$0xf]
  %v652 = vld [vmem:[%s5 + $0x20] sm:$0xf]
  %v653 = vld [vmem:[%s5 + $0x24] sm:$0xf]
  %v654 = vld [vmem:[%s5 + $0x28] sm:$0xf]
  %v655 = vld [vmem:[%s5 + $0x2c] sm:$0xf]
  %v656 = vld [vmem:[%s5 + $0x30] sm:$0xf]
  %v657 = vld [vmem:[%s5 + $0x34] sm:$0xf]
  %v658 = vld [vmem:[%s5 + $0x38] sm:$0xf]
  %v659 = vld [vmem:[%s5 + $0x3c] sm:$0xf]
  %v660 = vld [vmem:[%s6] sm:$0x1]
  %v662 = vlaneseq
  %v663 = vshrl.u32 %v662, 7
  %v664 = vsub.s32 0, %v663
  %v665 = vrot.slane %v660, %v664
  %v683 = vunpack.c.l.b16 %v644
  %v684 = vunpack.c.l.b16 %v645
  %v685 = vunpack.c.l.b16 %v646
  %v686 = vunpack.c.l.b16 %v647
  %v687 = vunpack.c.l.b16 %v648
  %v688 = vunpack.c.l.b16 %v649
  %v689 = vunpack.c.l.b16 %v650
  %v690 = vunpack.c.l.b16 %v651
  %v691 = vunpack.c.l.b16 %v652
  %v692 = vunpack.c.l.b16 %v653
  %v693 = vunpack.c.l.b16 %v654
  %v694 = vunpack.c.l.b16 %v655
  %v695 = vunpack.c.l.b16 %v656
  %v696 = vunpack.c.l.b16 %v657
  %v697 = vunpack.c.l.b16 %v658
  %v698 = vunpack.c.l.b16 %v659
  %v699 = vpack.c.b16 %v684, %v683
  %v700 = vpack.c.b16 %v686, %v685
  %v701 = vpack.c.b16 %v688, %v687
  %v702 = vpack.c.b16 %v690, %v689
  %v703 = vpack.c.b16 %v692, %v691
  %v704 = vpack.c.b16 %v694, %v693
  %v705 = vpack.c.b16 %v696, %v695
  %v706 = vpack.c.b16 %v698, %v697
  %715 = vmatprep.subr.bf16.mxu0 0
  %716 = vmatpush1.bf16.msra.mxu0 %v706
  %717 = vmatprep.subr.bf16.mxu0 0
  %718 = vmatpush1.bf16.msra.mxu0 %v705
  %719 = vmatprep.subr.bf16.mxu0 0
  %720 = vmatpush1.bf16.msra.mxu0 %v704
  %721 = vmatprep.subr.bf16.mxu0 0
  %722 = vmatpush1.bf16.msra.mxu0 %v703
  %723 = vmatprep.subr.bf16.mxu0 0
  %724 = vmatpush1.bf16.msra.mxu0 %v702
  %725 = vmatprep.subr.bf16.mxu0 0
  %726 = vmatpush1.bf16.msra.mxu0 %v701
  %727 = vmatprep.subr.bf16.mxu0 0
  %728 = vmatpush1.bf16.msra.mxu0 %v700
  %729 = vmatprep.subr.bf16.mxu0 0
  %730 = vmatpush1.bf16.msra.mxu0 %v699
  %731 = vmatprep.subr.bf16.mxu0 0
  %732 = vmatpush2.bf16.msra.mxu0 0
  %733 = vmatprep.subr.bf16.mxu0 0
  %734 = vmatpush2.bf16.msra.mxu0 0
  %735 = vmatprep.subr.bf16.mxu0 0
  %736 = vmatpush2.bf16.msra.mxu0 0
  %737 = vmatprep.subr.bf16.mxu0 0
  %738 = vmatpush2.bf16.msra.mxu0 0
  %739 = vmatprep.subr.bf16.mxu0 0
  %740 = vmatpush2.bf16.msra.mxu0 0
  %741 = vmatprep.subr.bf16.mxu0 0
  %742 = vmatpush2.bf16.msra.mxu0 0
  %743 = vmatprep.subr.bf16.mxu0 0
  %744 = vmatpush2.bf16.msra.mxu0 0
  %745 = vmatprep.subr.bf16.mxu0 0
  %746 = vmatpush2.bf16.msra.mxu0 0
  %747 = vmatprep.mubr.bf16.mxu0 0
  %748 = vmatmul.mubr.bf16.gmra.mxu0 %v636
  %v749 = vpop.f32.mrf.mxu0
  %v750 = vadd.f32 %v665, %v749
  %v751 = vpop.f32.mrf.mxu0
  %v752 = vpop.f32.mrf.mxu0
  %v753 = vadd.f32 %v665, %v752
  %v754 = vpop.f32.mrf.mxu0
  %755 = vmatprep.mubr.bf16.mxu0 0
  %756 = vmatmul.mubr.bf16.gmra.mxu0 %v637
  %v757 = vpop.f32.mrf.mxu0
  %v758 = vadd.f32 %v665, %v757
  %v759 = vpop.f32.mrf.mxu0
  %v760 = vpop.f32.mrf.mxu0
  %v761 = vadd.f32 %v665, %v760
  %v762 = vpop.f32.mrf.mxu0
  %763 = vmatprep.mubr.bf16.mxu0 0
  %764 = vmatmul.mubr.bf16.gmra.mxu0 %v638
  %v765 = vpop.f32.mrf.mxu0
  %v766 = vadd.f32 %v665, %v765
  %v767 = vpop.f32.mrf.mxu0
  %v768 = vpop.f32.mrf.mxu0
  %v769 = vadd.f32 %v665, %v768
  %v770 = vpop.f32.mrf.mxu0
  %771 = vmatprep.mubr.bf16.mxu0 0
  %772 = vmatmul.mubr.bf16.gmra.mxu0 %v639
  %v773 = vpop.f32.mrf.mxu0
  %v774 = vadd.f32 %v665, %v773
  %v775 = vpop.f32.mrf.mxu0
  %v776 = vpop.f32.mrf.mxu0
  %v777 = vadd.f32 %v665, %v776
  %v778 = vpop.f32.mrf.mxu0
  %779 = vmatprep.mubr.bf16.mxu0 0
  %780 = vmatmul.mubr.bf16.gmra.mxu0 %v640
  %v781 = vpop.f32.mrf.mxu0
  %v782 = vadd.f32 %v665, %v781
  %v783 = vpop.f32.mrf.mxu0
  %v784 = vpop.f32.mrf.mxu0
  %v785 = vadd.f32 %v665, %v784
  %v786 = vpop.f32.mrf.mxu0
  %787 = vmatprep.mubr.bf16.mxu0 0
  %788 = vmatmul.mubr.bf16.gmra.mxu0 %v641
  %v789 = vpop.f32.mrf.mxu0
  %v790 = vadd.f32 %v665, %v789
  %v791 = vpop.f32.mrf.mxu0
  %v792 = vpop.f32.mrf.mxu0
  %v793 = vadd.f32 %v665, %v792
  %v794 = vpop.f32.mrf.mxu0
  %795 = vmatprep.mubr.bf16.mxu0 0
  %796 = vmatmul.mubr.bf16.gmra.mxu0 %v642
  %v797 = vpop.f32.mrf.mxu0
  %v798 = vadd.f32 %v665, %v797
  %v799 = vpop.f32.mrf.mxu0
  %v800 = vpop.f32.mrf.mxu0
  %v801 = vadd.f32 %v665, %v800
  %v802 = vpop.f32.mrf.mxu0
  %803 = vmatprep.mubr.bf16.mxu0 0
  %804 = vmatmul.mubr.bf16.gmra.mxu0 %v643
  %v805 = vpop.f32.mrf.mxu0
  %v806 = vadd.f32 %v665, %v805
  %v807 = vpop.f32.mrf.mxu0
  %v808 = vpop.f32.mrf.mxu0
  %v809 = vadd.f32 %v665, %v808
  %v810 = vpop.f32.mrf.mxu0
  %811 = vdwg.mxu0
  %v812 = vmax.f32 %v750, 0.0
  %v813 = vmax.f32 %v753, 0.0
  %v814 = vmax.f32 %v758, 0.0
  %v815 = vmax.f32 %v761, 0.0
  %v816 = vmax.f32 %v766, 0.0
  %v817 = vmax.f32 %v769, 0.0
  %v818 = vmax.f32 %v774, 0.0
  %v819 = vmax.f32 %v777, 0.0
  %v820 = vmax.f32 %v782, 0.0
  %v821 = vmax.f32 %v785, 0.0
  %v822 = vmax.f32 %v790, 0.0
  %v823 = vmax.f32 %v793, 0.0
  %v824 = vmax.f32 %v798, 0.0
  %v825 = vmax.f32 %v801, 0.0
  %v826 = vmax.f32 %v806, 0.0
  %v827 = vmax.f32 %v809, 0.0
  %v828 = vpack.c.bf16 %v813, %v812
  %v829 = vpack.c.bf16 %v815, %v814
  %v830 = vpack.c.bf16 %v817, %v816
  %v831 = vpack.c.bf16 %v819, %v818
  %v832 = vpack.c.bf16 %v821, %v820
  %v833 = vpack.c.bf16 %v823, %v822
  %v834 = vpack.c.bf16 %v825, %v824
  %v835 = vpack.c.bf16 %v827, %v826
  %836 = vmatprep.subr.bf16.mxu0 0
  %837 = vmatpush1.bf16.msra.mxu0 %v835
  %838 = vmatprep.subr.bf16.mxu0 0
  %839 = vmatpush1.bf16.msra.mxu0 %v834
  %840 = vmatprep.subr.bf16.mxu0 0
  %841 = vmatpush1.bf16.msra.mxu0 %v833
  %842 = vmatprep.subr.bf16.mxu0 0
  %843 = vmatpush1.bf16.msra.mxu0 %v832
  %844 = vmatprep.subr.bf16.mxu0 0
  %845 = vmatpush1.bf16.msra.mxu0 %v831
  %846 = vmatprep.subr.bf16.mxu0 0
  %847 = vmatpush1.bf16.msra.mxu0 %v830
  %848 = vmatprep.subr.bf16.mxu0 0
  %849 = vmatpush1.bf16.msra.mxu0 %v829
  %850 = vmatprep.subr.bf16.mxu0 0
  %851 = vmatpush1.bf16.msra.mxu0 %v828
  %852 = vmatprep.subr.bf16.mxu0 0
  %853 = vmatpush2.bf16.msra.mxu0 0
  %854 = vmatprep.subr.bf16.mxu0 0
  %855 = vmatpush2.bf16.msra.mxu0 0
  %856 = vmatprep.subr.bf16.mxu0 0
  %857 = vmatpush2.bf16.msra.mxu0 0
  %858 = vmatprep.subr.bf16.mxu0 0
  %859 = vmatpush2.bf16.msra.mxu0 0
  %860 = vmatprep.subr.bf16.mxu0 0
  %861 = vmatpush2.bf16.msra.mxu0 0
  %862 = vmatprep.subr.bf16.mxu0 0
  %863 = vmatpush2.bf16.msra.mxu0 0
  %864 = vmatprep.subr.bf16.mxu0 0
  %865 = vmatpush2.bf16.msra.mxu0 0
  %866 = vmatprep.subr.bf16.mxu0 0
  %867 = vmatpush2.bf16.msra.mxu0 0
  %868 = vmatprep.mubr.bf16.mxu0 0
  %869 = vmatmul.mubr.bf16.gmra.mxu0 %v73
  %v870 = vpop.f32.mrf.mxu0
  %v871 = vadd.f32 0.0, %v870
  %v872 = vpop.f32.mrf.mxu0
  %v873 = vpop.f32.mrf.mxu0
  %v874 = vpop.f32.mrf.mxu0
  %875 = vdwg.mxu0
  %v876 = vpack.c.bf16 %v871, %v871
  %v877 = vld [vmem:[%s13] sm:$0xf]
  %v878 = vld [vmem:[%s13 + $0x4] sm:$0xf]
  %v879 = vld [vmem:[%s13 + $0x8] sm:$0xf]
  %v880 = vld [vmem:[%s13 + $0xc] sm:$0xf]
  %v881 = vld [vmem:[%s13 + $0x10] sm:$0xf]
  %v882 = vld [vmem:[%s13 + $0x14] sm:$0xf]
  %v883 = vld [vmem:[%s13 + $0x18] sm:$0xf]
  %v884 = vld [vmem:[%s13 + $0x1c] sm:$0xf]
  %v885 = vld [vmem:[%s13 + $0x20] sm:$0xf]
  %v886 = vld [vmem:[%s13 + $0x24] sm:$0xf]
  %v887 = vld [vmem:[%s13 + $0x28] sm:$0xf]
  %v888 = vld [vmem:[%s13 + $0x2c] sm:$0xf]
  %v889 = vld [vmem:[%s13 + $0x30] sm:$0xf]
  %v890 = vld [vmem:[%s13 + $0x34] sm:$0xf]
  %v891 = vld [vmem:[%s13 + $0x38] sm:$0xf]
  %v892 = vld [vmem:[%s13 + $0x3c] sm:$0xf]
  %v893 = vld [vmem:[%s14] sm:$0x1]
  %v895 = vlaneseq
  %v896 = vshrl.u32 %v895, 7
  %v897 = vsub.s32 0, %v896
  %v898 = vrot.slane %v893, %v897
  %v916 = vunpack.c.l.b16 %v877
  %v917 = vunpack.c.l.b16 %v878
  %v918 = vunpack.c.l.b16 %v879
  %v919 = vunpack.c.l.b16 %v880
  %v920 = vunpack.c.l.b16 %v881
  %v921 = vunpack.c.l.b16 %v882
  %v922 = vunpack.c.l.b16 %v883
  %v923 = vunpack.c.l.b16 %v884
  %v924 = vunpack.c.l.b16 %v885
  %v925 = vunpack.c.l.b16 %v886
  %v926 = vunpack.c.l.b16 %v887
  %v927 = vunpack.c.l.b16 %v888
  %v928 = vunpack.c.l.b16 %v889
  %v929 = vunpack.c.l.b16 %v890
  %v930 = vunpack.c.l.b16 %v891
  %v931 = vunpack.c.l.b16 %v892
  %v932 = vpack.c.b16 %v917, %v916
  %v933 = vpack.c.b16 %v919, %v918
  %v934 = vpack.c.b16 %v921, %v920
  %v935 = vpack.c.b16 %v923, %v922
  %v936 = vpack.c.b16 %v925, %v924
  %v937 = vpack.c.b16 %v927, %v926
  %v938 = vpack.c.b16 %v929, %v928
  %v939 = vpack.c.b16 %v931, %v930
  %948 = vmatprep.subr.bf16.mxu0 0
  %949 = vmatpush1.bf16.msra.mxu0 %v939
  %950 = vmatprep.subr.bf16.mxu0 0
  %951 = vmatpush1.bf16.msra.mxu0 %v938
  %952 = vmatprep.subr.bf16.mxu0 0
  %953 = vmatpush1.bf16.msra.mxu0 %v937
  %954 = vmatprep.subr.bf16.mxu0 0
  %955 = vmatpush1.bf16.msra.mxu0 %v936
  %956 = vmatprep.subr.bf16.mxu0 0
  %957 = vmatpush1.bf16.msra.mxu0 %v935
  %958 = vmatprep.subr.bf16.mxu0 0
  %959 = vmatpush1.bf16.msra.mxu0 %v934
  %960 = vmatprep.subr.bf16.mxu0 0
  %961 = vmatpush1.bf16.msra.mxu0 %v933
  %962 = vmatprep.subr.bf16.mxu0 0
  %963 = vmatpush1.bf16.msra.mxu0 %v932
  %964 = vmatprep.subr.bf16.mxu0 0
  %965 = vmatpush2.bf16.msra.mxu0 0
  %966 = vmatprep.subr.bf16.mxu0 0
  %967 = vmatpush2.bf16.msra.mxu0 0
  %968 = vmatprep.subr.bf16.mxu0 0
  %969 = vmatpush2.bf16.msra.mxu0 0
  %970 = vmatprep.subr.bf16.mxu0 0
  %971 = vmatpush2.bf16.msra.mxu0 0
  %972 = vmatprep.subr.bf16.mxu0 0
  %973 = vmatpush2.bf16.msra.mxu0 0
  %974 = vmatprep.subr.bf16.mxu0 0
  %975 = vmatpush2.bf16.msra.mxu0 0
  %976 = vmatprep.subr.bf16.mxu0 0
  %977 = vmatpush2.bf16.msra.mxu0 0
  %978 = vmatprep.subr.bf16.mxu0 0
  %979 = vmatpush2.bf16.msra.mxu0 0
  %980 = vmatprep.mubr.bf16.mxu0 0
  %981 = vmatmul.mubr.bf16.gmra.mxu0 %v876
  %v982 = vpop.f32.mrf.mxu0
  %v983 = vadd.f32 %v898, %v982
  %v984 = vpop.f32.mrf.mxu0
  %v985 = vpop.f32.mrf.mxu0
  %v986 = vpop.f32.mrf.mxu0
  %987 = vdwg.mxu0
  %v988 = vadd.f32 %v285, %v983
  %989 = vmatprep.subr.bf16.mxu0 0
  %990 = vmatpush1.bf16.msra.mxu0 %v835
  %991 = vmatprep.subr.bf16.mxu0 0
  %992 = vmatpush1.bf16.msra.mxu0 %v834
  %993 = vmatprep.subr.bf16.mxu0 0
  %994 = vmatpush1.bf16.msra.mxu0 %v833
  %995 = vmatprep.subr.bf16.mxu0 0
  %996 = vmatpush1.bf16.msra.mxu0 %v832
  %997 = vmatprep.subr.bf16.mxu0 0
  %998 = vmatpush1.bf16.msra.mxu0 %v831
  %999 = vmatprep.subr.bf16.mxu0 0
  %1000 = vmatpush1.bf16.msra.mxu0 %v830
  %1001 = vmatprep.subr.bf16.mxu0 0
  %1002 = vmatpush1.bf16.msra.mxu0 %v829
  %1003 = vmatprep.subr.bf16.mxu0 0
  %1004 = vmatpush1.bf16.msra.mxu0 %v828
  %1005 = vmatprep.subr.bf16.mxu0 0
  %1006 = vmatpush2.bf16.msra.mxu0 0
  %1007 = vmatprep.subr.bf16.mxu0 0
  %1008 = vmatpush2.bf16.msra.mxu0 0
  %1009 = vmatprep.subr.bf16.mxu0 0
  %1010 = vmatpush2.bf16.msra.mxu0 0
  %1011 = vmatprep.subr.bf16.mxu0 0
  %1012 = vmatpush2.bf16.msra.mxu0 0
  %1013 = vmatprep.subr.bf16.mxu0 0
  %1014 = vmatpush2.bf16.msra.mxu0 0
  %1015 = vmatprep.subr.bf16.mxu0 0
  %1016 = vmatpush2.bf16.msra.mxu0 0
  %1017 = vmatprep.subr.bf16.mxu0 0
  %1018 = vmatpush2.bf16.msra.mxu0 0
  %1019 = vmatprep.subr.bf16.mxu0 0
  %1020 = vmatpush2.bf16.msra.mxu0 0
  %1021 = vmatprep.mubr.bf16.mxu0 0
  %1022 = vmatmul.mubr.bf16.gmra.mxu0 %v322
  %v1023 = vpop.f32.mrf.mxu0
  %v1024 = vadd.f32 0.0, %v1023
  %v1025 = vpop.f32.mrf.mxu0
  %v1026 = vpop.f32.mrf.mxu0
  %v1027 = vadd.f32 0.0, %v1026
  %v1028 = vpop.f32.mrf.mxu0
  %1029 = vmatprep.mubr.bf16.mxu0 0
  %1030 = vmatmul.mubr.bf16.gmra.mxu0 %v323
  %v1031 = vpop.f32.mrf.mxu0
  %v1032 = vadd.f32 0.0, %v1031
  %v1033 = vpop.f32.mrf.mxu0
  %v1034 = vpop.f32.mrf.mxu0
  %v1035 = vadd.f32 0.0, %v1034
  %v1036 = vpop.f32.mrf.mxu0
  %1037 = vmatprep.mubr.bf16.mxu0 0
  %1038 = vmatmul.mubr.bf16.gmra.mxu0 %v324
  %v1039 = vpop.f32.mrf.mxu0
  %v1040 = vadd.f32 0.0, %v1039
  %v1041 = vpop.f32.mrf.mxu0
  %v1042 = vpop.f32.mrf.mxu0
  %v1043 = vadd.f32 0.0, %v1042
  %v1044 = vpop.f32.mrf.mxu0
  %1045 = vmatprep.mubr.bf16.mxu0 0
  %1046 = vmatmul.mubr.bf16.gmra.mxu0 %v325
  %v1047 = vpop.f32.mrf.mxu0
  %v1048 = vadd.f32 0.0, %v1047
  %v1049 = vpop.f32.mrf.mxu0
  %v1050 = vpop.f32.mrf.mxu0
  %v1051 = vadd.f32 0.0, %v1050
  %v1052 = vpop.f32.mrf.mxu0
  %1053 = vmatprep.mubr.bf16.mxu0 0
  %1054 = vmatmul.mubr.bf16.gmra.mxu0 %v326
  %v1055 = vpop.f32.mrf.mxu0
  %v1056 = vadd.f32 0.0, %v1055
  %v1057 = vpop.f32.mrf.mxu0
  %v1058 = vpop.f32.mrf.mxu0
  %v1059 = vadd.f32 0.0, %v1058
  %v1060 = vpop.f32.mrf.mxu0
  %1061 = vmatprep.mubr.bf16.mxu0 0
  %1062 = vmatmul.mubr.bf16.gmra.mxu0 %v327
  %v1063 = vpop.f32.mrf.mxu0
  %v1064 = vadd.f32 0.0, %v1063
  %v1065 = vpop.f32.mrf.mxu0
  %v1066 = vpop.f32.mrf.mxu0
  %v1067 = vadd.f32 0.0, %v1066
  %v1068 = vpop.f32.mrf.mxu0
  %1069 = vmatprep.mubr.bf16.mxu0 0
  %1070 = vmatmul.mubr.bf16.gmra.mxu0 %v328
  %v1071 = vpop.f32.mrf.mxu0
  %v1072 = vadd.f32 0.0, %v1071
  %v1073 = vpop.f32.mrf.mxu0
  %v1074 = vpop.f32.mrf.mxu0
  %v1075 = vadd.f32 0.0, %v1074
  %v1076 = vpop.f32.mrf.mxu0
  %1077 = vmatprep.mubr.bf16.mxu0 0
  %1078 = vmatmul.mubr.bf16.gmra.mxu0 %v329
  %v1079 = vpop.f32.mrf.mxu0
  %v1080 = vadd.f32 0.0, %v1079
  %v1081 = vpop.f32.mrf.mxu0
  %v1082 = vpop.f32.mrf.mxu0
  %v1083 = vadd.f32 0.0, %v1082
  %v1084 = vpop.f32.mrf.mxu0
  %1085 = vdwg.mxu0
  %v1086 = vpack.c.bf16 %v1027, %v1024
  %v1087 = vpack.c.bf16 %v1035, %v1032
  %v1088 = vpack.c.bf16 %v1043, %v1040
  %v1089 = vpack.c.bf16 %v1051, %v1048
  %v1090 = vpack.c.bf16 %v1059, %v1056
  %v1091 = vpack.c.bf16 %v1067, %v1064
  %v1092 = vpack.c.bf16 %v1075, %v1072
  %v1093 = vpack.c.bf16 %v1083, %v1080
  %v1094 = vld [vmem:[%s7] sm:$0xf]
  %v1095 = vld [vmem:[%s7 + $0x4] sm:$0xf]
  %v1096 = vld [vmem:[%s7 + $0x8] sm:$0xf]
  %v1097 = vld [vmem:[%s7 + $0xc] sm:$0xf]
  %v1098 = vld [vmem:[%s7 + $0x10] sm:$0xf]
  %v1099 = vld [vmem:[%s7 + $0x14] sm:$0xf]
  %v1100 = vld [vmem:[%s7 + $0x18] sm:$0xf]
  %v1101 = vld [vmem:[%s7 + $0x1c] sm:$0xf]
  %v1102 = vld [vmem:[%s7 + $0x20] sm:$0xf]
  %v1103 = vld [vmem:[%s7 + $0x24] sm:$0xf]
  %v1104 = vld [vmem:[%s7 + $0x28] sm:$0xf]
  %v1105 = vld [vmem:[%s7 + $0x2c] sm:$0xf]
  %v1106 = vld [vmem:[%s7 + $0x30] sm:$0xf]
  %v1107 = vld [vmem:[%s7 + $0x34] sm:$0xf]
  %v1108 = vld [vmem:[%s7 + $0x38] sm:$0xf]
  %v1109 = vld [vmem:[%s7 + $0x3c] sm:$0xf]
  %v1110 = vld [vmem:[%s8] sm:$0xff]
  %v1111 = vld [vmem:[%s8 + $0x8] sm:$0xff]
  %v1112 = vld [vmem:[%s8 + $0x10] sm:$0xff]
  %v1113 = vld [vmem:[%s8 + $0x18] sm:$0xff]
  %v1114 = vld [vmem:[%s8 + $0x20] sm:$0xff]
  %v1115 = vld [vmem:[%s8 + $0x28] sm:$0xff]
  %v1116 = vld [vmem:[%s8 + $0x30] sm:$0xff]
  %v1117 = vld [vmem:[%s8 + $0x38] sm:$0xff]
  %v1118 = vld [vmem:[%s8 + $0x40] sm:$0xff]
  %v1119 = vld [vmem:[%s8 + $0x48] sm:$0xff]
  %v1120 = vld [vmem:[%s8 + $0x50] sm:$0xff]
  %v1121 = vld [vmem:[%s8 + $0x58] sm:$0xff]
  %v1122 = vld [vmem:[%s8 + $0x60] sm:$0xff]
  %v1123 = vld [vmem:[%s8 + $0x68] sm:$0xff]
  %v1124 = vld [vmem:[%s8 + $0x70] sm:$0xff]
  %v1125 = vld [vmem:[%s8 + $0x78] sm:$0xff]
  %v1142 = vunpack.c.l.b16 %v1094
  %v1143 = vunpack.c.l.b16 %v1095
  %v1144 = vunpack.c.l.b16 %v1096
  %v1145 = vunpack.c.l.b16 %v1097
  %v1146 = vunpack.c.l.b16 %v1098
  %v1147 = vunpack.c.l.b16 %v1099
  %v1148 = vunpack.c.l.b16 %v1100
  %v1149 = vunpack.c.l.b16 %v1101
  %v1150 = vunpack.c.l.b16 %v1102
  %v1151 = vunpack.c.l.b16 %v1103
  %v1152 = vunpack.c.l.b16 %v1104
  %v1153 = vunpack.c.l.b16 %v1105
  %v1154 = vunpack.c.l.b16 %v1106
  %v1155 = vunpack.c.l.b16 %v1107
  %v1156 = vunpack.c.l.b16 %v1108
  %v1157 = vunpack.c.l.b16 %v1109
  %v1158 = vpack.c.b16 %v1143, %v1142
  %v1159 = vpack.c.b16 %v1145, %v1144
  %v1160 = vpack.c.b16 %v1147, %v1146
  %v1161 = vpack.c.b16 %v1149, %v1148
  %v1162 = vpack.c.b16 %v1151, %v1150
  %v1163 = vpack.c.b16 %v1153, %v1152
  %v1164 = vpack.c.b16 %v1155, %v1154
  %v1165 = vpack.c.b16 %v1157, %v1156
  %1174 = vmatprep.subr.bf16.mxu0 0
  %1175 = vmatpush1.bf16.msra.mxu0 %v1165
  %1176 = vmatprep.subr.bf16.mxu0 0
  %1177 = vmatpush1.bf16.msra.mxu0 %v1164
  %1178 = vmatprep.subr.bf16.mxu0 0
  %1179 = vmatpush1.bf16.msra.mxu0 %v1163
  %1180 = vmatprep.subr.bf16.mxu0 0
  %1181 = vmatpush1.bf16.msra.mxu0 %v1162
  %1182 = vmatprep.subr.bf16.mxu0 0
  %1183 = vmatpush1.bf16.msra.mxu0 %v1161
  %1184 = vmatprep.subr.bf16.mxu0 0
  %1185 = vmatpush1.bf16.msra.mxu0 %v1160
  %1186 = vmatprep.subr.bf16.mxu0 0
  %1187 = vmatpush1.bf16.msra.mxu0 %v1159
  %1188 = vmatprep.subr.bf16.mxu0 0
  %1189 = vmatpush1.bf16.msra.mxu0 %v1158
  %1190 = vmatprep.subr.bf16.mxu0 0
  %1191 = vmatpush2.bf16.msra.mxu0 0
  %1192 = vmatprep.subr.bf16.mxu0 0
  %1193 = vmatpush2.bf16.msra.mxu0 0
  %1194 = vmatprep.subr.bf16.mxu0 0
  %1195 = vmatpush2.bf16.msra.mxu0 0
  %1196 = vmatprep.subr.bf16.mxu0 0
  %1197 = vmatpush2.bf16.msra.mxu0 0
  %1198 = vmatprep.subr.bf16.mxu0 0
  %1199 = vmatpush2.bf16.msra.mxu0 0
  %1200 = vmatprep.subr.bf16.mxu0 0
  %1201 = vmatpush2.bf16.msra.mxu0 0
  %1202 = vmatprep.subr.bf16.mxu0 0
  %1203 = vmatpush2.bf16.msra.mxu0 0
  %1204 = vmatprep.subr.bf16.mxu0 0
  %1205 = vmatpush2.bf16.msra.mxu0 0
  %1206 = vmatprep.mubr.bf16.mxu0 0
  %1207 = vmatmul.mubr.bf16.gmra.mxu0 %v1086
  %v1208 = vpop.f32.mrf.mxu0
  %v1209 = vadd.f32 %v1110, %v1208
  %v1210 = vpop.f32.mrf.mxu0
  %v1211 = vpop.f32.mrf.mxu0
  %v1212 = vadd.f32 %v1111, %v1211
  %v1213 = vpop.f32.mrf.mxu0
  %1214 = vmatprep.mubr.bf16.mxu0 0
  %1215 = vmatmul.mubr.bf16.gmra.mxu0 %v1087
  %v1216 = vpop.f32.mrf.mxu0
  %v1217 = vadd.f32 %v1112, %v1216
  %v1218 = vpop.f32.mrf.mxu0
  %v1219 = vpop.f32.mrf.mxu0
  %v1220 = vadd.f32 %v1113, %v1219
  %v1221 = vpop.f32.mrf.mxu0
  %1222 = vmatprep.mubr.bf16.mxu0 0
  %1223 = vmatmul.mubr.bf16.gmra.mxu0 %v1088
  %v1224 = vpop.f32.mrf.mxu0
  %v1225 = vadd.f32 %v1114, %v1224
  %v1226 = vpop.f32.mrf.mxu0
  %v1227 = vpop.f32.mrf.mxu0
  %v1228 = vadd.f32 %v1115, %v1227
  %v1229 = vpop.f32.mrf.mxu0
  %1230 = vmatprep.mubr.bf16.mxu0 0
  %1231 = vmatmul.mubr.bf16.gmra.mxu0 %v1089
  %v1232 = vpop.f32.mrf.mxu0
  %v1233 = vadd.f32 %v1116, %v1232
  %v1234 = vpop.f32.mrf.mxu0
  %v1235 = vpop.f32.mrf.mxu0
  %v1236 = vadd.f32 %v1117, %v1235
  %v1237 = vpop.f32.mrf.mxu0
  %1238 = vmatprep.mubr.bf16.mxu0 0
  %1239 = vmatmul.mubr.bf16.gmra.mxu0 %v1090
  %v1240 = vpop.f32.mrf.mxu0
  %v1241 = vadd.f32 %v1118, %v1240
  %v1242 = vpop.f32.mrf.mxu0
  %v1243 = vpop.f32.mrf.mxu0
  %v1244 = vadd.f32 %v1119, %v1243
  %v1245 = vpop.f32.mrf.mxu0
  %1246 = vmatprep.mubr.bf16.mxu0 0
  %1247 = vmatmul.mubr.bf16.gmra.mxu0 %v1091
  %v1248 = vpop.f32.mrf.mxu0
  %v1249 = vadd.f32 %v1120, %v1248
  %v1250 = vpop.f32.mrf.mxu0
  %v1251 = vpop.f32.mrf.mxu0
  %v1252 = vadd.f32 %v1121, %v1251
  %v1253 = vpop.f32.mrf.mxu0
  %1254 = vmatprep.mubr.bf16.mxu0 0
  %1255 = vmatmul.mubr.bf16.gmra.mxu0 %v1092
  %v1256 = vpop.f32.mrf.mxu0
  %v1257 = vadd.f32 %v1122, %v1256
  %v1258 = vpop.f32.mrf.mxu0
  %v1259 = vpop.f32.mrf.mxu0
  %v1260 = vadd.f32 %v1123, %v1259
  %v1261 = vpop.f32.mrf.mxu0
  %1262 = vmatprep.mubr.bf16.mxu0 0
  %1263 = vmatmul.mubr.bf16.gmra.mxu0 %v1093
  %v1264 = vpop.f32.mrf.mxu0
  %v1265 = vadd.f32 %v1124, %v1264
  %v1266 = vpop.f32.mrf.mxu0
  %v1267 = vpop.f32.mrf.mxu0
  %v1268 = vadd.f32 %v1125, %v1267
  %v1269 = vpop.f32.mrf.mxu0
  %1270 = vdwg.mxu0
  %v1271 = vmax.f32 %v1209, 0.0
  %v1272 = vmax.f32 %v1212, 0.0
  %v1273 = vmax.f32 %v1217, 0.0
  %v1274 = vmax.f32 %v1220, 0.0
  %v1275 = vmax.f32 %v1225, 0.0
  %v1276 = vmax.f32 %v1228, 0.0
  %v1277 = vmax.f32 %v1233, 0.0
  %v1278 = vmax.f32 %v1236, 0.0
  %v1279 = vmax.f32 %v1241, 0.0
  %v1280 = vmax.f32 %v1244, 0.0
  %v1281 = vmax.f32 %v1249, 0.0
  %v1282 = vmax.f32 %v1252, 0.0
  %v1283 = vmax.f32 %v1257, 0.0
  %v1284 = vmax.f32 %v1260, 0.0
  %v1285 = vmax.f32 %v1265, 0.0
  %v1286 = vmax.f32 %v1268, 0.0
  %v1287 = vpack.c.bf16 %v1272, %v1271
  %v1288 = vpack.c.bf16 %v1274, %v1273
  %v1289 = vpack.c.bf16 %v1276, %v1275
  %v1290 = vpack.c.bf16 %v1278, %v1277
  %v1291 = vpack.c.bf16 %v1280, %v1279
  %v1292 = vpack.c.bf16 %v1282, %v1281
  %v1293 = vpack.c.bf16 %v1284, %v1283
  %v1294 = vpack.c.bf16 %v1286, %v1285
  %v1295 = vld [vmem:[%s9] sm:$0xf]
  %v1296 = vld [vmem:[%s9 + $0x4] sm:$0xf]
  %v1297 = vld [vmem:[%s9 + $0x8] sm:$0xf]
  %v1298 = vld [vmem:[%s9 + $0xc] sm:$0xf]
  %v1299 = vld [vmem:[%s9 + $0x10] sm:$0xf]
  %v1300 = vld [vmem:[%s9 + $0x14] sm:$0xf]
  %v1301 = vld [vmem:[%s9 + $0x18] sm:$0xf]
  %v1302 = vld [vmem:[%s9 + $0x1c] sm:$0xf]
  %v1303 = vld [vmem:[%s9 + $0x20] sm:$0xf]
  %v1304 = vld [vmem:[%s9 + $0x24] sm:$0xf]
  %v1305 = vld [vmem:[%s9 + $0x28] sm:$0xf]
  %v1306 = vld [vmem:[%s9 + $0x2c] sm:$0xf]
  %v1307 = vld [vmem:[%s9 + $0x30] sm:$0xf]
  %v1308 = vld [vmem:[%s9 + $0x34] sm:$0xf]
  %v1309 = vld [vmem:[%s9 + $0x38] sm:$0xf]
  %v1310 = vld [vmem:[%s9 + $0x3c] sm:$0xf]
  %v1311 = vld [vmem:[%s10] sm:$0x1]
  %v1313 = vlaneseq
  %v1314 = vshrl.u32 %v1313, 7
  %v1315 = vsub.s32 0, %v1314
  %v1316 = vrot.slane %v1311, %v1315
  %v1334 = vunpack.c.l.b16 %v1295
  %v1335 = vunpack.c.l.b16 %v1296
  %v1336 = vunpack.c.l.b16 %v1297
  %v1337 = vunpack.c.l.b16 %v1298
  %v1338 = vunpack.c.l.b16 %v1299
  %v1339 = vunpack.c.l.b16 %v1300
  %v1340 = vunpack.c.l.b16 %v1301
  %v1341 = vunpack.c.l.b16 %v1302
  %v1342 = vunpack.c.l.b16 %v1303
  %v1343 = vunpack.c.l.b16 %v1304
  %v1344 = vunpack.c.l.b16 %v1305
  %v1345 = vunpack.c.l.b16 %v1306
  %v1346 = vunpack.c.l.b16 %v1307
  %v1347 = vunpack.c.l.b16 %v1308
  %v1348 = vunpack.c.l.b16 %v1309
  %v1349 = vunpack.c.l.b16 %v1310
  %v1350 = vpack.c.b16 %v1335, %v1334
  %v1351 = vpack.c.b16 %v1337, %v1336
  %v1352 = vpack.c.b16 %v1339, %v1338
  %v1353 = vpack.c.b16 %v1341, %v1340
  %v1354 = vpack.c.b16 %v1343, %v1342
  %v1355 = vpack.c.b16 %v1345, %v1344
  %v1356 = vpack.c.b16 %v1347, %v1346
  %v1357 = vpack.c.b16 %v1349, %v1348
  %1366 = vmatprep.subr.bf16.mxu0 0
  %1367 = vmatpush1.bf16.msra.mxu0 %v1357
  %1368 = vmatprep.subr.bf16.mxu0 0
  %1369 = vmatpush1.bf16.msra.mxu0 %v1356
  %1370 = vmatprep.subr.bf16.mxu0 0
  %1371 = vmatpush1.bf16.msra.mxu0 %v1355
  %1372 = vmatprep.subr.bf16.mxu0 0
  %1373 = vmatpush1.bf16.msra.mxu0 %v1354
  %1374 = vmatprep.subr.bf16.mxu0 0
  %1375 = vmatpush1.bf16.msra.mxu0 %v1353
  %1376 = vmatprep.subr.bf16.mxu0 0
  %1377 = vmatpush1.bf16.msra.mxu0 %v1352
  %1378 = vmatprep.subr.bf16.mxu0 0
  %1379 = vmatpush1.bf16.msra.mxu0 %v1351
  %1380 = vmatprep.subr.bf16.mxu0 0
  %1381 = vmatpush1.bf16.msra.mxu0 %v1350
  %1382 = vmatprep.subr.bf16.mxu0 0
  %1383 = vmatpush2.bf16.msra.mxu0 0
  %1384 = vmatprep.subr.bf16.mxu0 0
  %1385 = vmatpush2.bf16.msra.mxu0 0
  %1386 = vmatprep.subr.bf16.mxu0 0
  %1387 = vmatpush2.bf16.msra.mxu0 0
  %1388 = vmatprep.subr.bf16.mxu0 0
  %1389 = vmatpush2.bf16.msra.mxu0 0
  %1390 = vmatprep.subr.bf16.mxu0 0
  %1391 = vmatpush2.bf16.msra.mxu0 0
  %1392 = vmatprep.subr.bf16.mxu0 0
  %1393 = vmatpush2.bf16.msra.mxu0 0
  %1394 = vmatprep.subr.bf16.mxu0 0
  %1395 = vmatpush2.bf16.msra.mxu0 0
  %1396 = vmatprep.subr.bf16.mxu0 0
  %1397 = vmatpush2.bf16.msra.mxu0 0
  %1398 = vmatprep.mubr.bf16.mxu0 0
  %1399 = vmatmul.mubr.bf16.gmra.mxu0 %v1287
  %v1400 = vpop.f32.mrf.mxu0
  %v1401 = vadd.f32 %v1316, %v1400
  %v1402 = vpop.f32.mrf.mxu0
  %v1403 = vpop.f32.mrf.mxu0
  %v1404 = vadd.f32 %v1316, %v1403
  %v1405 = vpop.f32.mrf.mxu0
  %1406 = vmatprep.mubr.bf16.mxu0 0
  %1407 = vmatmul.mubr.bf16.gmra.mxu0 %v1288
  %v1408 = vpop.f32.mrf.mxu0
  %v1409 = vadd.f32 %v1316, %v1408
  %v1410 = vpop.f32.mrf.mxu0
  %v1411 = vpop.f32.mrf.mxu0
  %v1412 = vadd.f32 %v1316, %v1411
  %v1413 = vpop.f32.mrf.mxu0
  %1414 = vmatprep.mubr.bf16.mxu0 0
  %1415 = vmatmul.mubr.bf16.gmra.mxu0 %v1289
  %v1416 = vpop.f32.mrf.mxu0
  %v1417 = vadd.f32 %v1316, %v1416
  %v1418 = vpop.f32.mrf.mxu0
  %v1419 = vpop.f32.mrf.mxu0
  %v1420 = vadd.f32 %v1316, %v1419
  %v1421 = vpop.f32.mrf.mxu0
  %1422 = vmatprep.mubr.bf16.mxu0 0
  %1423 = vmatmul.mubr.bf16.gmra.mxu0 %v1290
  %v1424 = vpop.f32.mrf.mxu0
  %v1425 = vadd.f32 %v1316, %v1424
  %v1426 = vpop.f32.mrf.mxu0
  %v1427 = vpop.f32.mrf.mxu0
  %v1428 = vadd.f32 %v1316, %v1427
  %v1429 = vpop.f32.mrf.mxu0
  %1430 = vmatprep.mubr.bf16.mxu0 0
  %1431 = vmatmul.mubr.bf16.gmra.mxu0 %v1291
  %v1432 = vpop.f32.mrf.mxu0
  %v1433 = vadd.f32 %v1316, %v1432
  %v1434 = vpop.f32.mrf.mxu0
  %v1435 = vpop.f32.mrf.mxu0
  %v1436 = vadd.f32 %v1316, %v1435
  %v1437 = vpop.f32.mrf.mxu0
  %1438 = vmatprep.mubr.bf16.mxu0 0
  %1439 = vmatmul.mubr.bf16.gmra.mxu0 %v1292
  %v1440 = vpop.f32.mrf.mxu0
  %v1441 = vadd.f32 %v1316, %v1440
  %v1442 = vpop.f32.mrf.mxu0
  %v1443 = vpop.f32.mrf.mxu0
  %v1444 = vadd.f32 %v1316, %v1443
  %v1445 = vpop.f32.mrf.mxu0
  %1446 = vmatprep.mubr.bf16.mxu0 0
  %1447 = vmatmul.mubr.bf16.gmra.mxu0 %v1293
  %v1448 = vpop.f32.mrf.mxu0
  %v1449 = vadd.f32 %v1316, %v1448
  %v1450 = vpop.f32.mrf.mxu0
  %v1451 = vpop.f32.mrf.mxu0
  %v1452 = vadd.f32 %v1316, %v1451
  %v1453 = vpop.f32.mrf.mxu0
  %1454 = vmatprep.mubr.bf16.mxu0 0
  %1455 = vmatmul.mubr.bf16.gmra.mxu0 %v1294
  %v1456 = vpop.f32.mrf.mxu0
  %v1457 = vadd.f32 %v1316, %v1456
  %v1458 = vpop.f32.mrf.mxu0
  %v1459 = vpop.f32.mrf.mxu0
  %v1460 = vadd.f32 %v1316, %v1459
  %v1461 = vpop.f32.mrf.mxu0
  %1462 = vdwg.mxu0
  %v1463 = vmax.f32 %v1401, 0.0
  %v1464 = vmax.f32 %v1404, 0.0
  %v1465 = vmax.f32 %v1409, 0.0
  %v1466 = vmax.f32 %v1412, 0.0
  %v1467 = vmax.f32 %v1417, 0.0
  %v1468 = vmax.f32 %v1420, 0.0
  %v1469 = vmax.f32 %v1425, 0.0
  %v1470 = vmax.f32 %v1428, 0.0
  %v1471 = vmax.f32 %v1433, 0.0
  %v1472 = vmax.f32 %v1436, 0.0
  %v1473 = vmax.f32 %v1441, 0.0
  %v1474 = vmax.f32 %v1444, 0.0
  %v1475 = vmax.f32 %v1449, 0.0
  %v1476 = vmax.f32 %v1452, 0.0
  %v1477 = vmax.f32 %v1457, 0.0
  %v1478 = vmax.f32 %v1460, 0.0
  %v1479 = vpack.c.bf16 %v1464, %v1463
  %v1480 = vpack.c.bf16 %v1466, %v1465
  %v1481 = vpack.c.bf16 %v1468, %v1467
  %v1482 = vpack.c.bf16 %v1470, %v1469
  %v1483 = vpack.c.bf16 %v1472, %v1471
  %v1484 = vpack.c.bf16 %v1474, %v1473
  %v1485 = vpack.c.bf16 %v1476, %v1475
  %v1486 = vpack.c.bf16 %v1478, %v1477
  %1487 = vmatprep.subr.bf16.mxu0 0
  %1488 = vmatpush1.bf16.msra.mxu0 %v1486
  %1489 = vmatprep.subr.bf16.mxu0 0
  %1490 = vmatpush1.bf16.msra.mxu0 %v1485
  %1491 = vmatprep.subr.bf16.mxu0 0
  %1492 = vmatpush1.bf16.msra.mxu0 %v1484
  %1493 = vmatprep.subr.bf16.mxu0 0
  %1494 = vmatpush1.bf16.msra.mxu0 %v1483
  %1495 = vmatprep.subr.bf16.mxu0 0
  %1496 = vmatpush1.bf16.msra.mxu0 %v1482
  %1497 = vmatprep.subr.bf16.mxu0 0
  %1498 = vmatpush1.bf16.msra.mxu0 %v1481
  %1499 = vmatprep.subr.bf16.mxu0 0
  %1500 = vmatpush1.bf16.msra.mxu0 %v1480
  %1501 = vmatprep.subr.bf16.mxu0 0
  %1502 = vmatpush1.bf16.msra.mxu0 %v1479
  %1503 = vmatprep.subr.bf16.mxu0 0
  %1504 = vmatpush2.bf16.msra.mxu0 0
  %1505 = vmatprep.subr.bf16.mxu0 0
  %1506 = vmatpush2.bf16.msra.mxu0 0
  %1507 = vmatprep.subr.bf16.mxu0 0
  %1508 = vmatpush2.bf16.msra.mxu0 0
  %1509 = vmatprep.subr.bf16.mxu0 0
  %1510 = vmatpush2.bf16.msra.mxu0 0
  %1511 = vmatprep.subr.bf16.mxu0 0
  %1512 = vmatpush2.bf16.msra.mxu0 0
  %1513 = vmatprep.subr.bf16.mxu0 0
  %1514 = vmatpush2.bf16.msra.mxu0 0
  %1515 = vmatprep.subr.bf16.mxu0 0
  %1516 = vmatpush2.bf16.msra.mxu0 0
  %1517 = vmatprep.subr.bf16.mxu0 0
  %1518 = vmatpush2.bf16.msra.mxu0 0
  %1519 = vmatprep.mubr.bf16.mxu0 0
  %1520 = vmatmul.mubr.bf16.gmra.mxu0 %v73
  %v1521 = vpop.f32.mrf.mxu0
  %v1522 = vadd.f32 0.0, %v1521
  %v1523 = vpop.f32.mrf.mxu0
  %v1524 = vpop.f32.mrf.mxu0
  %v1525 = vpop.f32.mrf.mxu0
  %1526 = vdwg.mxu0
  %v1527 = vpack.c.bf16 %v1522, %v1522
  %v1528 = vld [vmem:[%s15] sm:$0xf]
  %v1529 = vld [vmem:[%s15 + $0x4] sm:$0xf]
  %v1530 = vld [vmem:[%s15 + $0x8] sm:$0xf]
  %v1531 = vld [vmem:[%s15 + $0xc] sm:$0xf]
  %v1532 = vld [vmem:[%s15 + $0x10] sm:$0xf]
  %v1533 = vld [vmem:[%s15 + $0x14] sm:$0xf]
  %v1534 = vld [vmem:[%s15 + $0x18] sm:$0xf]
  %v1535 = vld [vmem:[%s15 + $0x1c] sm:$0xf]
  %v1536 = vld [vmem:[%s15 + $0x20] sm:$0xf]
  %v1537 = vld [vmem:[%s15 + $0x24] sm:$0xf]
  %v1538 = vld [vmem:[%s15 + $0x28] sm:$0xf]
  %v1539 = vld [vmem:[%s15 + $0x2c] sm:$0xf]
  %v1540 = vld [vmem:[%s15 + $0x30] sm:$0xf]
  %v1541 = vld [vmem:[%s15 + $0x34] sm:$0xf]
  %v1542 = vld [vmem:[%s15 + $0x38] sm:$0xf]
  %v1543 = vld [vmem:[%s15 + $0x3c] sm:$0xf]
  %v1544 = vld [vmem:[%s16] sm:$0x1]
  %v1546 = vlaneseq
  %v1547 = vshrl.u32 %v1546, 7
  %v1548 = vsub.s32 0, %v1547
  %v1549 = vrot.slane %v1544, %v1548
  %v1567 = vunpack.c.l.b16 %v1528
  %v1568 = vunpack.c.l.b16 %v1529
  %v1569 = vunpack.c.l.b16 %v1530
  %v1570 = vunpack.c.l.b16 %v1531
  %v1571 = vunpack.c.l.b16 %v1532
  %v1572 = vunpack.c.l.b16 %v1533
  %v1573 = vunpack.c.l.b16 %v1534
  %v1574 = vunpack.c.l.b16 %v1535
  %v1575 = vunpack.c.l.b16 %v1536
  %v1576 = vunpack.c.l.b16 %v1537
  %v1577 = vunpack.c.l.b16 %v1538
  %v1578 = vunpack.c.l.b16 %v1539
  %v1579 = vunpack.c.l.b16 %v1540
  %v1580 = vunpack.c.l.b16 %v1541
  %v1581 = vunpack.c.l.b16 %v1542
  %v1582 = vunpack.c.l.b16 %v1543
  %v1583 = vpack.c.b16 %v1568, %v1567
  %v1584 = vpack.c.b16 %v1570, %v1569
  %v1585 = vpack.c.b16 %v1572, %v1571
  %v1586 = vpack.c.b16 %v1574, %v1573
  %v1587 = vpack.c.b16 %v1576, %v1575
  %v1588 = vpack.c.b16 %v1578, %v1577
  %v1589 = vpack.c.b16 %v1580, %v1579
  %v1590 = vpack.c.b16 %v1582, %v1581
  %1599 = vmatprep.subr.bf16.mxu0 0
  %1600 = vmatpush1.bf16.msra.mxu0 %v1590
  %1601 = vmatprep.subr.bf16.mxu0 0
  %1602 = vmatpush1.bf16.msra.mxu0 %v1589
  %1603 = vmatprep.subr.bf16.mxu0 0
  %1604 = vmatpush1.bf16.msra.mxu0 %v1588
  %1605 = vmatprep.subr.bf16.mxu0 0
  %1606 = vmatpush1.bf16.msra.mxu0 %v1587
  %1607 = vmatprep.subr.bf16.mxu0 0
  %1608 = vmatpush1.bf16.msra.mxu0 %v1586
  %1609 = vmatprep.subr.bf16.mxu0 0
  %1610 = vmatpush1.bf16.msra.mxu0 %v1585
  %1611 = vmatprep.subr.bf16.mxu0 0
  %1612 = vmatpush1.bf16.msra.mxu0 %v1584
  %1613 = vmatprep.subr.bf16.mxu0 0
  %1614 = vmatpush1.bf16.msra.mxu0 %v1583
  %1615 = vmatprep.subr.bf16.mxu0 0
  %1616 = vmatpush2.bf16.msra.mxu0 0
  %1617 = vmatprep.subr.bf16.mxu0 0
  %1618 = vmatpush2.bf16.msra.mxu0 0
  %1619 = vmatprep.subr.bf16.mxu0 0
  %1620 = vmatpush2.bf16.msra.mxu0 0
  %1621 = vmatprep.subr.bf16.mxu0 0
  %1622 = vmatpush2.bf16.msra.mxu0 0
  %1623 = vmatprep.subr.bf16.mxu0 0
  %1624 = vmatpush2.bf16.msra.mxu0 0
  %1625 = vmatprep.subr.bf16.mxu0 0
  %1626 = vmatpush2.bf16.msra.mxu0 0
  %1627 = vmatprep.subr.bf16.mxu0 0
  %1628 = vmatpush2.bf16.msra.mxu0 0
  %1629 = vmatprep.subr.bf16.mxu0 0
  %1630 = vmatpush2.bf16.msra.mxu0 0
  %1631 = vmatprep.mubr.bf16.mxu0 0
  %1632 = vmatmul.mubr.bf16.gmra.mxu0 %v1527
  %v1633 = vpop.f32.mrf.mxu0
  %v1634 = vadd.f32 %v1549, %v1633
  %v1635 = vpop.f32.mrf.mxu0
  %v1636 = vpop.f32.mrf.mxu0
  %v1637 = vpop.f32.mrf.mxu0
  %1638 = vdwg.mxu0
  %v1639 = vadd.f32 %v988, %v1634
  %1640 = vst [vmem:[%s17] sm:$0xff] %v1639
  // Predicated region
  $region70: #{graphegin_forward.1} parent=0 // pred_check
    _
  $region71: #{graphegin_forward.1} parent=0 // pred_check_branch
    %1642 = sbr.rel (0) target = $region73
  $region72: #{graphegin_forward.1} parent=0 // pred_region
    _
  $region73: #{graphegin_forward.1} parent=0 // pred_fallthru
    _
  // Predicated region
  $region74: #{graphegin_forward.1} parent=0 // pred_check
    _
  $region75: #{graphegin_forward.1} parent=0 // pred_check_branch
    %1644 = sbr.rel (0) target = $region77
  $region76: #{graphegin_forward.1} parent=0 // pred_region
    _
  $region77: #{graphegin_forward.1} parent=0 // pred_fallthru
    _

</llo_original>
